<compile_context>
chip_gen: v6e
topology: v6e:2x2x1
jax: 0.10.0
libtpu: 0.0.40
codegen_flags: <defaults>
</compile_context>

<pallas_src>
import functools

import jax
import jax.numpy as jnp
from jax import lax
from jax.experimental import pallas as pl
from jax.experimental.pallas import tpu as pltpu

ELMO_DIM = 1024
BN_EPS = 1e-5


def _round_up(x, m):
    return ((x + m - 1) // m) * m


def _elmo_classifier_kernel(inv_len_ref, l0_ref, l1_ref, w_ref, b_ref,
                            out_ref, acc_ref, *, seq_len, s_tile, mask_seq):
    """Grid = (B tiles, S tiles).  S is the reduction axis.

    inv_len_ref : (b_t, 1)        1 / lengths for this batch tile
    l0_ref      : (b_t, s_t, D)   elmo representation 0 tile
    l1_ref      : (b_t, s_t, D)   elmo representation 1 tile
    w_ref       : (2*D, C_pad)    BN-folded linear weight (VMEM-resident)
    b_ref       : (1, C_pad)      BN-folded bias
    out_ref     : (b_t, C_pad)
    acc_ref     : (b_t, 2*D) f32  running sums over the sequence axis
    """
    s = pl.program_id(1)

    @pl.when(s == 0)
    def _():
        acc_ref[...] = jnp.zeros_like(acc_ref)

    x0 = l0_ref[...].astype(jnp.float32)
    x1 = l1_ref[...].astype(jnp.float32)
    if mask_seq:
        # Last sequence tile overhangs the array: zero out positions >= S so
        # stale VMEM contents never reach the running sums (memory-bound
        # kernel -> the extra VPU select is free).
        pos = s * s_tile + lax.broadcasted_iota(jnp.int32, x0.shape, 1)
        valid = pos < seq_len
        x0 = jnp.where(valid, x0, 0.0)
        x1 = jnp.where(valid, x1, 0.0)

    # Accumulate per-batch sequence sums; concat fused into one accumulator.
    acc_ref[:, :ELMO_DIM] += jnp.sum(x0, axis=1)
    acc_ref[:, ELMO_DIM:] += jnp.sum(x1, axis=1)

    @pl.when(s == pl.num_programs(1) - 1)
    def _():
        # Mean pooling, then a single MXU matmul against the BN-folded weight.
        pooled = acc_ref[...] * inv_len_ref[...]                    # (b_t, 2D)
        out_ref[...] = (jnp.dot(pooled, w_ref[...],
                                preferred_element_type=jnp.float32)
                        + b_ref[...])
        # TODO(synk): nn.Dropout is stochastic in train mode; eval => identity.


def elmo_model_forward(layer0, layer1, lengths, params, *,
                       b_tile=8, s_tile=128):
    """layer0/layer1: (B, S, D) f32, lengths: (B, 1) or (B,) f32."""
    B, S, D = layer0.shape
    assert layer1.shape == (B, S, D) and D == ELMO_DIM
    C = params["w"].shape[1]
    assert params["w"].shape[0] == 2 * D

    # ---- fold BatchNorm1d (inference stats) + linear bias into W, b --------
    scale = params["bn_gamma"] * lax.rsqrt(params["bn_var"] + BN_EPS)   # (C,)
    w_f = (params["w"] * scale[None, :]).astype(jnp.float32)            # (2D,C)
    b_f = ((params["b"] - params["bn_mean"]) * scale
           + params["bn_beta"]).astype(jnp.float32)

    # ---- pad class dim to a lane-dense multiple of 128 ---------------------
    C_pad = _round_up(C, 128)
    w_f = jnp.pad(w_f, ((0, 0), (0, C_pad - C)))
    b_f = jnp.pad(b_f, (0, C_pad - C)).reshape(1, C_pad)

    # ---- tile sizes (no padding copies of the big inputs) -------------------
    b_t = min(b_tile, B)                       # batch dim has no (8,128) rule
    s_t = min(s_tile, _round_up(S, 8))         # sublane dim of the 3-D blocks
    grid_b = pl.cdiv(B, b_t)
    grid_s = pl.cdiv(S, s_t)
    B_pad = grid_b * b_t
    mask_seq = (S % s_t) != 0

    lengths = jnp.asarray(lengths, jnp.float32).reshape(B, 1)
    inv_len = jnp.where(lengths > 0, 1.0 / lengths, 0.0)
    inv_len = jnp.pad(inv_len, ((0, B_pad - B), (0, 0)))   # padded rows -> 0

    kernel = functools.partial(_elmo_classifier_kernel,
                               seq_len=S, s_tile=s_t, mask_seq=mask_seq)

    out = pl.pallas_call(
        kernel,
        out_shape=jax.ShapeDtypeStruct((B_pad, C_pad), jnp.float32),
        grid_spec=pltpu.PrefetchScalarGridSpec(
            num_scalar_prefetch=0,
            grid=(grid_b, grid_s),
            in_specs=[
                pl.BlockSpec((b_t, 1), lambda b, s: (b, 0)),           # inv_len
                pl.BlockSpec((b_t, s_t, D), lambda b, s: (b, s, 0)),   # layer0
                pl.BlockSpec((b_t, s_t, D), lambda b, s: (b, s, 0)),   # layer1
                pl.BlockSpec((2 * D, C_pad), lambda b, s: (0, 0)),     # W' (resident)
                pl.BlockSpec((1, C_pad), lambda b, s: (0, 0)),         # b'
            ],
            out_specs=pl.BlockSpec((b_t, C_pad), lambda b, s: (b, 0)),
            scratch_shapes=[pltpu.VMEM((b_t, 2 * D), jnp.float32)],
        ),
        compiler_params=pltpu.CompilerParams(
            dimension_semantics=("parallel", "arbitrary"),
            vmem_limit_bytes=32 * 1024 * 1024,
        ),
    )(inv_len, layer0, layer1, w_f, b_f)

    return out[:B, :C]


def reference_forward(layer0, layer1, lengths, params):
    """Pure-JAX reference of the original (unfused) module math."""
    lengths = jnp.asarray(lengths, jnp.float32).reshape(layer0.shape[0], 1)
    pooled0 = layer0.sum(axis=1) / lengths
    pooled1 = layer1.sum(axis=1) / lengths
    layer = jnp.concatenate([pooled0, pooled1], axis=1)
    logits = jnp.dot(layer, params["w"],
                     precision=lax.Precision.HIGHEST) + params["b"]
    inv_std = lax.rsqrt(params["bn_var"] + BN_EPS)
    return (logits - params["bn_mean"]) * inv_std * params["bn_gamma"] \
        + params["bn_beta"]


def _make_case(key, B, S, n_classes):
    k0, k1, k2, k3, k4 = jax.random.split(key, 5)
    layer0 = jax.random.normal(k0, (B, S, ELMO_DIM), dtype=jnp.float32)
    layer1 = jax.random.normal(k1, (B, S, ELMO_DIM), dtype=jnp.float32)
    lengths = jax.random.randint(k2, (B, 1), 1, S + 1).astype(jnp.float32)
    params = {
        "w": 0.02 * jax.random.normal(k3, (2 * ELMO_DIM, n_classes),
                                      dtype=jnp.float32),
        "b": 0.01 * jax.random.normal(k4, (n_classes,), dtype=jnp.float32),
        "bn_gamma": jnp.full((n_classes,), 1.1, jnp.float32),
        "bn_beta": jnp.full((n_classes,), 0.05, jnp.float32),
        "bn_mean": jnp.full((n_classes,), 0.02, jnp.float32),
        "bn_var": jnp.full((n_classes,), 0.9, jnp.float32),
    }
    return layer0, layer1, lengths, params


if __name__ == "__main__":
    key = jax.random.PRNGKey(0)
    k_a, k_b = jax.random.split(key)

    # Case A: tile-aligned shapes (B=4, S=32) -> no masking path.
    l0, l1, lens, params = _make_case(k_a, B=4, S=32, n_classes=16)
    out = jax.block_until_ready(elmo_model_forward(l0, l1, lens, params))
    ref = reference_forward(l0, l1, lens, params)
    assert out.shape == (4, 16)
    assert jnp.allclose(out, ref, atol=2e-3, rtol=2e-3), "case A mismatch"

    # Case B: ragged shapes (B=10, S=19) -> exercises the in-kernel sequence
    # mask and the overhanging last batch tile (no HBM padding copies).
    l0, l1, lens, params = _make_case(k_b, B=10, S=19, n_classes=7)
    out = jax.block_until_ready(elmo_model_forward(l0, l1, lens, params))
    ref = reference_forward(l0, l1, lens, params)
    assert out.shape == (10, 7)
    assert jnp.allclose(out, ref, atol=2e-3, rtol=2e-3), "case B mismatch"

    print("KERNEL_OK")
</pallas_src>

<mosaic_0001>
module attributes {stable_mosaic.version = 11 : i64} {
  func.func @_elmo_classifier_kernel(%arg0: i32, %arg1: i32, %arg2: memref<4x1xf32, #tpu.memory_space<vmem>>, %arg3: memref<4x32x1024xf32, #tpu.memory_space<vmem>>, %arg4: memref<4x32x1024xf32, #tpu.memory_space<vmem>>, %arg5: memref<2048x128xf32, #tpu.memory_space<vmem>>, %arg6: memref<1x128xf32, #tpu.memory_space<vmem>>, %arg7: memref<4x128xf32, #tpu.memory_space<vmem>>, %arg8: memref<4x2048xf32, #tpu.memory_space<vmem>>) attributes {dimension_semantics = [#tpu.dimension_semantics<parallel>, #tpu.dimension_semantics<arbitrary>], iteration_bounds = array<i64: 1, 1>, scalar_prefetch = 0 : i64, scratch_operands = 1 : i64, tpu.core_type = #tpu.core_type<tc>, window_params = [{transform_indices = @transform_0, window_bounds = array<i64: 4, 1>}, {transform_indices = @transform_1, window_bounds = array<i64: 4, 32, 1024>}, {transform_indices = @transform_2, window_bounds = array<i64: 4, 32, 1024>}, {pipeline_mode = #tpu.pipeline_mode<synchronous>, transform_indices = @transform_3, window_bounds = array<i64: 2048, 128>}, {pipeline_mode = #tpu.pipeline_mode<synchronous>, transform_indices = @transform_4, window_bounds = array<i64: 1, 128>}, {transform_indices = @transform_5, window_bounds = array<i64: 4, 128>}]} {
    %c0_i32 = arith.constant 0 : i32
    %0 = arith.cmpi eq, %arg1, %c0_i32 : i32
    %1 = arith.extui %0 : i1 to i32
    %c0_i32_0 = arith.constant 0 : i32
    %2 = arith.cmpi ne, %1, %c0_i32_0 : i32
    scf.if %2 {
      %cst_16 = arith.constant 0.000000e+00 : f32
      %16 = vector.broadcast %cst_16 : f32 to vector<4x2048xf32>
      %c0_17 = arith.constant 0 : index
      %c0_18 = arith.constant 0 : index
      %17 = vector.load %arg8[%c0_17, %c0_18] : memref<4x2048xf32, #tpu.memory_space<vmem>>, vector<4x2048xf32>
      tpu.vector_store %arg8[%c0_17, %c0_18], %16 {strides = array<i32>} : memref<4x2048xf32, #tpu.memory_space<vmem>>, vector<4x2048xf32>,
    } else {
    }
    %c0 = arith.constant 0 : index
    %c0_1 = arith.constant 0 : index
    %c0_2 = arith.constant 0 : index
    %3 = vector.load %arg3[%c0, %c0_1, %c0_2] : memref<4x32x1024xf32, #tpu.memory_space<vmem>>, vector<4x32x1024xf32>
    %c0_3 = arith.constant 0 : index
    %c0_4 = arith.constant 0 : index
    %c0_5 = arith.constant 0 : index
    %4 = vector.load %arg4[%c0_3, %c0_4, %c0_5] : memref<4x32x1024xf32, #tpu.memory_space<vmem>>, vector<4x32x1024xf32>
    %c0_6 = arith.constant 0 : index
    %c0_7 = arith.constant 0 : index
    %5 = vector.load %arg8[%c0_6, %c0_7] : memref<4x2048xf32, #tpu.memory_space<vmem>>, vector<4x1024xf32>
    %cst = arith.constant dense<0.000000e+00> : vector<4x1024xf32>
    %6 = vector.multi_reduction <add>, %3, %cst [1] : vector<4x32x1024xf32> to vector<4x1024xf32>
    %7 = arith.addf %5, %6 : vector<4x1024xf32>
    %c0_8 = arith.constant 0 : index
    %c0_9 = arith.constant 0 : index
    %8 = vector.load %arg8[%c0_8, %c0_9] : memref<4x2048xf32, #tpu.memory_space<vmem>>, vector<4x1024xf32>
    tpu.vector_store %arg8[%c0_8, %c0_9], %7 {strides = array<i32>} : memref<4x2048xf32, #tpu.memory_space<vmem>>, vector<4x1024xf32>,
    %c0_10 = arith.constant 0 : index
    %c1024 = arith.constant 1024 : index
    %9 = vector.load %arg8[%c0_10, %c1024] : memref<4x2048xf32, #tpu.memory_space<vmem>>, vector<4x1024xf32>
    %cst_11 = arith.constant dense<0.000000e+00> : vector<4x1024xf32>
    %10 = vector.multi_reduction <add>, %4, %cst_11 [1] : vector<4x32x1024xf32> to vector<4x1024xf32>
    %11 = arith.addf %9, %10 : vector<4x1024xf32>
    %c0_12 = arith.constant 0 : index
    %c1024_13 = arith.constant 1024 : index
    %12 = vector.load %arg8[%c0_12, %c1024_13] : memref<4x2048xf32, #tpu.memory_space<vmem>>, vector<4x1024xf32>
    tpu.vector_store %arg8[%c0_12, %c1024_13], %11 {strides = array<i32>} : memref<4x2048xf32, #tpu.memory_space<vmem>>, vector<4x1024xf32>,
    %c0_i32_14 = arith.constant 0 : i32
    %13 = arith.cmpi eq, %arg1, %c0_i32_14 : i32
    %14 = arith.extui %13 : i1 to i32
    %c0_i32_15 = arith.constant 0 : i32
    %15 = arith.cmpi ne, %14, %c0_i32_15 : i32
    scf.if %15 {
      %c0_16 = arith.constant 0 : index
      %c0_17 = arith.constant 0 : index
      %16 = vector.load %arg8[%c0_16, %c0_17] : memref<4x2048xf32, #tpu.memory_space<vmem>>, vector<4x2048xf32>
      %c0_18 = arith.constant 0 : index
      %c0_19 = arith.constant 0 : index
      %17 = vector.load %arg2[%c0_18, %c0_19] : memref<4x1xf32, #tpu.memory_space<vmem>>, vector<4x1xf32>
      %18 = vector.broadcast %17 : vector<4x1xf32> to vector<4x2048xf32>
      %19 = arith.mulf %16, %18 : vector<4x2048xf32>
      %c0_20 = arith.constant 0 : index
      %c0_21 = arith.constant 0 : index
      %20 = vector.load %arg5[%c0_20, %c0_21] : memref<2048x128xf32, #tpu.memory_space<vmem>>, vector<2048x128xf32>
      %cst_22 = arith.constant dense<0.000000e+00> : vector<4x128xf32>
      %21 = tpu.matmul %19, %20, %cst_22 {dimension_numbers = #tpu.dot_dimension_numbers<[1], [0], [0], [1], [0, 0, 1, 1], [], []>} : vector<4x2048xf32>, vector<2048x128xf32>, vector<4x128xf32> -> vector<4x128xf32>
      %c0_23 = arith.constant 0 : index
      %c0_24 = arith.constant 0 : index
      %22 = vector.load %arg6[%c0_23, %c0_24] : memref<1x128xf32, #tpu.memory_space<vmem>>, vector<1x128xf32>
      %23 = vector.broadcast %22 : vector<1x128xf32> to vector<4x128xf32>
      %24 = arith.addf %21, %23 : vector<4x128xf32>
      %c0_25 = arith.constant 0 : index
      %c0_26 = arith.constant 0 : index
      %25 = vector.load %arg7[%c0_25, %c0_26] : memref<4x128xf32, #tpu.memory_space<vmem>>, vector<4x128xf32>
      tpu.vector_store %arg7[%c0_25, %c0_26], %24 {strides = array<i32>} : memref<4x128xf32, #tpu.memory_space<vmem>>, vector<4x128xf32>,
    } else {
    }
    return
  }
  func.func @transform_0(%arg0: i32, %arg1: i32) -> (i32, i32) {
    %c0_i32 = arith.constant 0 : i32
    %c0_i32_0 = arith.constant 0 : i32
    return %arg0, %c0_i32 : i32, i32
  }
  func.func @transform_1(%arg0: i32, %arg1: i32) -> (i32, i32, i32) {
    %c0_i32 = arith.constant 0 : i32
    %c0_i32_0 = arith.constant 0 : i32
    return %arg0, %arg1, %c0_i32 : i32, i32, i32
  }
  func.func @transform_2(%arg0: i32, %arg1: i32) -> (i32, i32, i32) {
    %c0_i32 = arith.constant 0 : i32
    %c0_i32_0 = arith.constant 0 : i32
    return %arg0, %arg1, %c0_i32 : i32, i32, i32
  }
  func.func @transform_3(%arg0: i32, %arg1: i32) -> (i32, i32) {
    %c0_i32 = arith.constant 0 : i32
    %c0_i32_0 = arith.constant 0 : i32
    %c0_i32_1 = arith.constant 0 : i32
    return %c0_i32, %c0_i32_0 : i32, i32
  }
  func.func @transform_4(%arg0: i32, %arg1: i32) -> (i32, i32) {
    %c0_i32 = arith.constant 0 : i32
    %c0_i32_0 = arith.constant 0 : i32
    %c0_i32_1 = arith.constant 0 : i32
    return %c0_i32, %c0_i32_0 : i32, i32
  }
  func.func @transform_5(%arg0: i32, %arg1: i32) -> (i32, i32) {
    %c0_i32 = arith.constant 0 : i32
    %c0_i32_0 = arith.constant 0 : i32
    return %arg0, %c0_i32 : i32, i32
  }
}

</mosaic_0001>

<llo_original>
// kernel: tpu_custom_call.1
$region0: #{tpu_custom_call.1}
  #allocation0 [shape = 'u32[]', space=smem, size = 0x4, offset = 0x4, fixed_abs, tag = 'smem constant byte address 0x4 - core index']
  #allocation1 [shape = 'u32[144,128]{1,0:T(1,128)}', space=vmem, size = 0x12000, scoped, tag = 'internal scratch']
  #allocation2 [shape = 'f32[4,2048]{1,0:T(4,128)}', space=vmem, size = 0x8000, scoped, tag = 'scratch operand']
  %s0 = inlined_call_operand.vmem [shape: f32[4,1], index: 0, kind: input, shape index: {}]
  %s1 = inlined_call_operand.hbm [shape: f32[4,32,1024], index: 1, kind: input, shape index: {}]
  %s2 = inlined_call_operand.hbm [shape: f32[4,32,1024], index: 2, kind: input, shape index: {}]
  %s3 = inlined_call_operand.hbm [shape: f32[2048,128], index: 3, kind: input, shape index: {}]
  %s4 = inlined_call_operand.vmem [shape: f32[1,128], index: 4, kind: input, shape index: {}]
  %s5 = inlined_call_operand.hbm [shape: f32[4,128], index: 5, kind: output, shape index: {}]
  %s6 = sld [smem:[#allocation0]]
  $region50: #{tpu_custom_call.1} parent=0
    _
  %s8 = ssub.s32 1, %s6
  %s9 = scalar_select 0, %s8, %s6
  $region1: #{tpu_custom_call.1} parent=0
    #allocation3 [shape = 'u8[524288]{0}', space=vmem, size = 0x80000, scoped, tag = 'input window, operand 1, single buffered']
    #allocation4 [shape = 's32[1]{0}', space=sflag, size = 0x4, scoped, tag = 'scoped memory for tpu_custom_call.1']
    #allocation5 [shape = 's32[1]{0}', space=sflag, size = 0x4, scoped, tag = 'scoped memory for tpu_custom_call.1']
    #allocation6 [shape = 'u8[524288]{0}', space=vmem, size = 0x80000, scoped, tag = 'input window, operand 2, single buffered']
    #allocation7 [shape = 's32[1]{0}', space=sflag, size = 0x4, scoped, tag = 'scoped memory for tpu_custom_call.1']
    #allocation8 [shape = 'u8[1048576]{0}', space=vmem, size = 0x100000, scoped, tag = 'input window, operand 3, single buffered']
    #allocation9 [shape = 'u8[2048]{0}', space=vmem, size = 0x800, scoped, tag = 'output window, operand 0, single buffered']
    %10 = vsyncpa [#allocation4], 0
    %11 = vsyncpa [#allocation7], 0
    %12 = vsyncpa [#allocation5], 0
    // Predicated region
    $region2: #{tpu_custom_call.1} parent=1 // pred_check
      _
    $region3: #{tpu_custom_call.1} parent=1 // pred_check_branch
      %14 = sbr.rel (0) target = $region5
    $region4: #{tpu_custom_call.1} parent=1 // pred_region
      _
    $region5: #{tpu_custom_call.1} parent=1 // pred_fallthru
      _
    // Predicated region
    $region6: #{tpu_custom_call.1} parent=1 // pred_check
      _
    $region7: #{tpu_custom_call.1} parent=1 // pred_check_branch
      %16 = sbr.rel (0) target = $region9
    $region8: #{tpu_custom_call.1} parent=1 // pred_region
      %s18 = ssub.s32 16384, 16384
      %19 = vsyncadd [#allocation4], %s18
      %s20 = sshll.u32 [#allocation3], 4
      %s21 = int_to_ptr.vmem [resolvable:$true] %s20
      %26 = dma.hbm_to_vmem [thread:$0]  %s1, 16384, %s21, [#allocation4], 1024, 1024, 64
    $region9: #{tpu_custom_call.1} parent=1 // pred_fallthru
      _
    // Predicated region
    $region10: #{tpu_custom_call.1} parent=1 // pred_check
      _
    $region11: #{tpu_custom_call.1} parent=1 // pred_check_branch
      %28 = sbr.rel (0) target = $region13
    $region12: #{tpu_custom_call.1} parent=1 // pred_region
      %s30 = ssub.s32 16384, 16384
      %31 = vsyncadd [#allocation7], %s30
      %s32 = sshll.u32 [#allocation6], 4
      %s33 = int_to_ptr.vmem [resolvable:$true] %s32
      %38 = dma.hbm_to_vmem [thread:$0]  %s2, 16384, %s33, [#allocation7], 1024, 1024, 64
    $region13: #{tpu_custom_call.1} parent=1 // pred_fallthru
      _
    // Predicated region
    $region14: #{tpu_custom_call.1} parent=1 // pred_check
      _
    $region15: #{tpu_custom_call.1} parent=1 // pred_check_branch
      %40 = sbr.rel (0) target = $region17
    $region16: #{tpu_custom_call.1} parent=1 // pred_region
      %s42 = ssub.s32 32768, 32768
      %43 = vsyncadd [#allocation7], %s42
      %s44 = sshll.u32 [#allocation8], 4
      %s45 = int_to_ptr.vmem [resolvable:$true] %s44
      %50 = dma.hbm_to_vmem [thread:$0]  %s3, 32768, %s45, [#allocation7], 128, 128, 8
    $region17: #{tpu_custom_call.1} parent=1 // pred_fallthru
      _
    // Predicated region
    $region18: #{tpu_custom_call.1} parent=1 // pred_check
      _
    $region19: #{tpu_custom_call.1} parent=1 // pred_check_branch
      %52 = sbr.rel (0) target = $region21
    $region20: #{tpu_custom_call.1} parent=1 // pred_region
      _
    $region21: #{tpu_custom_call.1} parent=1 // pred_fallthru
      _
    // Predicated region
    $region22: #{tpu_custom_call.1} parent=1 // pred_check
      _
    $region23: #{tpu_custom_call.1} parent=1 // pred_check_branch
      %54 = sbr.rel (0) target = $region25
    $region24: #{tpu_custom_call.1} parent=1 // pred_region
      %55 = dma.done [#allocation4], 16384
    $region25: #{tpu_custom_call.1} parent=1 // pred_fallthru
      _
    // Predicated region
    $region26: #{tpu_custom_call.1} parent=1 // pred_check
      _
    $region27: #{tpu_custom_call.1} parent=1 // pred_check_branch
      %57 = sbr.rel (0) target = $region29
    $region28: #{tpu_custom_call.1} parent=1 // pred_region
      %58 = dma.done [#allocation7], 16384
    $region29: #{tpu_custom_call.1} parent=1 // pred_fallthru
      _
    // Predicated region
    $region30: #{tpu_custom_call.1} parent=1 // pred_check
      _
    $region31: #{tpu_custom_call.1} parent=1 // pred_check_branch
      %60 = sbr.rel (0) target = $region33
    $region32: #{tpu_custom_call.1} parent=1 // pred_region
      %61 = dma.done [#allocation7], 32768
    $region33: #{tpu_custom_call.1} parent=1 // pred_fallthru
      _
    %p62 = scmp.eq.s32.totalorder 0, 0
    // Predicated region
    $region34: #{tpu_custom_call.1} parent=1 // pred_check
      %p63 = pneg %p62
    $region35: #{tpu_custom_call.1} parent=1 // pred_check_branch
      %65 = sbr.rel (%p63) target = $region37
    $region36: #{tpu_custom_call.1} parent=1 // pred_region
      %66 = vst [vmem:[#allocation2] sm:$0xff] 0.0
      %67 = vst [vmem:[#allocation2 + $0x8] sm:$0xff] 0.0
      %68 = vst [vmem:[#allocation2 + $0x10] sm:$0xff] 0.0
      %69 = vst [vmem:[#allocation2 + $0x18] sm:$0xff] 0.0
      %70 = vst [vmem:[#allocation2 + $0x20] sm:$0xff] 0.0
      %71 = vst [vmem:[#allocation2 + $0x28] sm:$0xff] 0.0
      %72 = vst [vmem:[#allocation2 + $0x30] sm:$0xff] 0.0
      %73 = vst [vmem:[#allocation2 + $0x38] sm:$0xff] 0.0
    $region37: #{tpu_custom_call.1} parent=1 // pred_fallthru
      _
    %v74 = vld [vmem:[#allocation3] sm:$0xff]
    %v75 = vld [vmem:[#allocation3 + $0x8] sm:$0xff]
    %v76 = vld [vmem:[#allocation3 + $0x10] sm:$0xff]
    %v77 = vld [vmem:[#allocation3 + $0x18] sm:$0xff]
    %v78 = vld [vmem:[#allocation3 + $0x20] sm:$0xff]
    %v79 = vld [vmem:[#allocation3 + $0x28] sm:$0xff]
    %v80 = vld [vmem:[#allocation3 + $0x30] sm:$0xff]
    %v81 = vld [vmem:[#allocation3 + $0x38] sm:$0xff]
    %v82 = vld [vmem:[#allocation3 + $0x40] sm:$0xff]
    %v83 = vld [vmem:[#allocation3 + $0x48] sm:$0xff]
    %v84 = vld [vmem:[#allocation3 + $0x50] sm:$0xff]
    %v85 = vld [vmem:[#allocation3 + $0x58] sm:$0xff]
    %v86 = vld [vmem:[#allocation3 + $0x60] sm:$0xff]
    %v87 = vld [vmem:[#allocation3 + $0x68] sm:$0xff]
    %v88 = vld [vmem:[#allocation3 + $0x70] sm:$0xff]
    %v89 = vld [vmem:[#allocation3 + $0x78] sm:$0xff]
    %v90 = vld [vmem:[#allocation3 + $0x80] sm:$0xff]
    %v91 = vld [vmem:[#allocation3 + $0x88] sm:$0xff]
    %v92 = vld [vmem:[#allocation3 + $0x90] sm:$0xff]
    %v93 = vld [vmem:[#allocation3 + $0x98] sm:$0xff]
    %v94 = vld [vmem:[#allocation3 + $0xa0] sm:$0xff]
    %v95 = vld [vmem:[#allocation3 + $0xa8] sm:$0xff]
    %v96 = vld [vmem:[#allocation3 + $0xb0] sm:$0xff]
    %v97 = vld [vmem:[#allocation3 + $0xb8] sm:$0xff]
    %v98 = vld [vmem:[#allocation3 + $0xc0] sm:$0xff]
    %v99 = vld [vmem:[#allocation3 + $0xc8] sm:$0xff]
    %v100 = vld [vmem:[#allocation3 + $0xd0] sm:$0xff]
    %v101 = vld [vmem:[#allocation3 + $0xd8] sm:$0xff]
    %v102 = vld [vmem:[#allocation3 + $0xe0] sm:$0xff]
    %v103 = vld [vmem:[#allocation3 + $0xe8] sm:$0xff]
    %v104 = vld [vmem:[#allocation3 + $0xf0] sm:$0xff]
    %v105 = vld [vmem:[#allocation3 + $0xf8] sm:$0xff]
    %v106 = vld [vmem:[#allocation3 + $0x100] sm:$0xff]
    %v107 = vld [vmem:[#allocation3 + $0x108] sm:$0xff]
    %v108 = vld [vmem:[#allocation3 + $0x110] sm:$0xff]
    %v109 = vld [vmem:[#allocation3 + $0x118] sm:$0xff]
    %v110 = vld [vmem:[#allocation3 + $0x120] sm:$0xff]
    %v111 = vld [vmem:[#allocation3 + $0x128] sm:$0xff]
    %v112 = vld [vmem:[#allocation3 + $0x130] sm:$0xff]
    %v113 = vld [vmem:[#allocation3 + $0x138] sm:$0xff]
    %v114 = vld [vmem:[#allocation3 + $0x140] sm:$0xff]
    %v115 = vld [vmem:[#allocation3 + $0x148] sm:$0xff]
    %v116 = vld [vmem:[#allocation3 + $0x150] sm:$0xff]
    %v117 = vld [vmem:[#allocation3 + $0x158] sm:$0xff]
    %v118 = vld [vmem:[#allocation3 + $0x160] sm:$0xff]
    %v119 = vld [vmem:[#allocation3 + $0x168] sm:$0xff]
    %v120 = vld [vmem:[#allocation3 + $0x170] sm:$0xff]
    %v121 = vld [vmem:[#allocation3 + $0x178] sm:$0xff]
    %v122 = vld [vmem:[#allocation3 + $0x180] sm:$0xff]
    %v123 = vld [vmem:[#allocation3 + $0x188] sm:$0xff]
    %v124 = vld [vmem:[#allocation3 + $0x190] sm:$0xff]
    %v125 = vld [vmem:[#allocation3 + $0x198] sm:$0xff]
    %v126 = vld [vmem:[#allocation3 + $0x1a0] sm:$0xff]
    %v127 = vld [vmem:[#allocation3 + $0x1a8] sm:$0xff]
    %v128 = vld [vmem:[#allocation3 + $0x1b0] sm:$0xff]
    %v129 = vld [vmem:[#allocation3 + $0x1b8] sm:$0xff]
    %v130 = vld [vmem:[#allocation3 + $0x1c0] sm:$0xff]
    %v131 = vld [vmem:[#allocation3 + $0x1c8] sm:$0xff]
    %v132 = vld [vmem:[#allocation3 + $0x1d0] sm:$0xff]
    %v133 = vld [vmem:[#allocation3 + $0x1d8] sm:$0xff]
    %v134 = vld [vmem:[#allocation3 + $0x1e0] sm:$0xff]
    %v135 = vld [vmem:[#allocation3 + $0x1e8] sm:$0xff]
    %v136 = vld [vmem:[#allocation3 + $0x1f0] sm:$0xff]
    %v137 = vld [vmem:[#allocation3 + $0x1f8] sm:$0xff]
    %v138 = vld [vmem:[#allocation3 + $0x200] sm:$0xff]
    %v139 = vld [vmem:[#allocation3 + $0x208] sm:$0xff]
    %v140 = vld [vmem:[#allocation3 + $0x210] sm:$0xff]
    %v141 = vld [vmem:[#allocation3 + $0x218] sm:$0xff]
    %v142 = vld [vmem:[#allocation3 + $0x220] sm:$0xff]
    %v143 = vld [vmem:[#allocation3 + $0x228] sm:$0xff]
    %v144 = vld [vmem:[#allocation3 + $0x230] sm:$0xff]
    %v145 = vld [vmem:[#allocation3 + $0x238] sm:$0xff]
    %v146 = vld [vmem:[#allocation3 + $0x240] sm:$0xff]
    %v147 = vld [vmem:[#allocation3 + $0x248] sm:$0xff]
    %v148 = vld [vmem:[#allocation3 + $0x250] sm:$0xff]
    %v149 = vld [vmem:[#allocation3 + $0x258] sm:$0xff]
    %v150 = vld [vmem:[#allocation3 + $0x260] sm:$0xff]
    %v151 = vld [vmem:[#allocation3 + $0x268] sm:$0xff]
    %v152 = vld [vmem:[#allocation3 + $0x270] sm:$0xff]
    %v153 = vld [vmem:[#allocation3 + $0x278] sm:$0xff]
    %v154 = vld [vmem:[#allocation3 + $0x280] sm:$0xff]
    %v155 = vld [vmem:[#allocation3 + $0x288] sm:$0xff]
    %v156 = vld [vmem:[#allocation3 + $0x290] sm:$0xff]
    %v157 = vld [vmem:[#allocation3 + $0x298] sm:$0xff]
    %v158 = vld [vmem:[#allocation3 + $0x2a0] sm:$0xff]
    %v159 = vld [vmem:[#allocation3 + $0x2a8] sm:$0xff]
    %v160 = vld [vmem:[#allocation3 + $0x2b0] sm:$0xff]
    %v161 = vld [vmem:[#allocation3 + $0x2b8] sm:$0xff]
    %v162 = vld [vmem:[#allocation3 + $0x2c0] sm:$0xff]
    %v163 = vld [vmem:[#allocation3 + $0x2c8] sm:$0xff]
    %v164 = vld [vmem:[#allocation3 + $0x2d0] sm:$0xff]
    %v165 = vld [vmem:[#allocation3 + $0x2d8] sm:$0xff]
    %v166 = vld [vmem:[#allocation3 + $0x2e0] sm:$0xff]
    %v167 = vld [vmem:[#allocation3 + $0x2e8] sm:$0xff]
    %v168 = vld [vmem:[#allocation3 + $0x2f0] sm:$0xff]
    %v169 = vld [vmem:[#allocation3 + $0x2f8] sm:$0xff]
    %v170 = vld [vmem:[#allocation3 + $0x300] sm:$0xff]
    %v171 = vld [vmem:[#allocation3 + $0x308] sm:$0xff]
    %v172 = vld [vmem:[#allocation3 + $0x310] sm:$0xff]
    %v173 = vld [vmem:[#allocation3 + $0x318] sm:$0xff]
    %v174 = vld [vmem:[#allocation3 + $0x320] sm:$0xff]
    %v175 = vld [vmem:[#allocation3 + $0x328] sm:$0xff]
    %v176 = vld [vmem:[#allocation3 + $0x330] sm:$0xff]
    %v177 = vld [vmem:[#allocation3 + $0x338] sm:$0xff]
    %v178 = vld [vmem:[#allocation3 + $0x340] sm:$0xff]
    %v179 = vld [vmem:[#allocation3 + $0x348] sm:$0xff]
    %v180 = vld [vmem:[#allocation3 + $0x350] sm:$0xff]
    %v181 = vld [vmem:[#allocation3 + $0x358] sm:$0xff]
    %v182 = vld [vmem:[#allocation3 + $0x360] sm:$0xff]
    %v183 = vld [vmem:[#allocation3 + $0x368] sm:$0xff]
    %v184 = vld [vmem:[#allocation3 + $0x370] sm:$0xff]
    %v185 = vld [vmem:[#allocation3 + $0x378] sm:$0xff]
    %v186 = vld [vmem:[#allocation3 + $0x380] sm:$0xff]
    %v187 = vld [vmem:[#allocation3 + $0x388] sm:$0xff]
    %v188 = vld [vmem:[#allocation3 + $0x390] sm:$0xff]
    %v189 = vld [vmem:[#allocation3 + $0x398] sm:$0xff]
    %v190 = vld [vmem:[#allocation3 + $0x3a0] sm:$0xff]
    %v191 = vld [vmem:[#allocation3 + $0x3a8] sm:$0xff]
    %v192 = vld [vmem:[#allocation3 + $0x3b0] sm:$0xff]
    %v193 = vld [vmem:[#allocation3 + $0x3b8] sm:$0xff]
    %v194 = vld [vmem:[#allocation3 + $0x3c0] sm:$0xff]
    %v195 = vld [vmem:[#allocation3 + $0x3c8] sm:$0xff]
    %v196 = vld [vmem:[#allocation3 + $0x3d0] sm:$0xff]
    %v197 = vld [vmem:[#allocation3 + $0x3d8] sm:$0xff]
    %v198 = vld [vmem:[#allocation3 + $0x3e0] sm:$0xff]
    %v199 = vld [vmem:[#allocation3 + $0x3e8] sm:$0xff]
    %v200 = vld [vmem:[#allocation3 + $0x3f0] sm:$0xff]
    %v201 = vld [vmem:[#allocation3 + $0x3f8] sm:$0xff]
    %v202 = vld [vmem:[#allocation6] sm:$0xff]
    %v203 = vld [vmem:[#allocation6 + $0x8] sm:$0xff]
    %v204 = vld [vmem:[#allocation6 + $0x10] sm:$0xff]
    %v205 = vld [vmem:[#allocation6 + $0x18] sm:$0xff]
    %v206 = vld [vmem:[#allocation6 + $0x20] sm:$0xff]
    %v207 = vld [vmem:[#allocation6 + $0x28] sm:$0xff]
    %v208 = vld [vmem:[#allocation6 + $0x30] sm:$0xff]
    %v209 = vld [vmem:[#allocation6 + $0x38] sm:$0xff]
    %v210 = vld [vmem:[#allocation6 + $0x40] sm:$0xff]
    %v211 = vld [vmem:[#allocation6 + $0x48] sm:$0xff]
    %v212 = vld [vmem:[#allocation6 + $0x50] sm:$0xff]
    %v213 = vld [vmem:[#allocation6 + $0x58] sm:$0xff]
    %v214 = vld [vmem:[#allocation6 + $0x60] sm:$0xff]
    %v215 = vld [vmem:[#allocation6 + $0x68] sm:$0xff]
    %v216 = vld [vmem:[#allocation6 + $0x70] sm:$0xff]
    %v217 = vld [vmem:[#allocation6 + $0x78] sm:$0xff]
    %v218 = vld [vmem:[#allocation6 + $0x80] sm:$0xff]
    %v219 = vld [vmem:[#allocation6 + $0x88] sm:$0xff]
    %v220 = vld [vmem:[#allocation6 + $0x90] sm:$0xff]
    %v221 = vld [vmem:[#allocation6 + $0x98] sm:$0xff]
    %v222 = vld [vmem:[#allocation6 + $0xa0] sm:$0xff]
    %v223 = vld [vmem:[#allocation6 + $0xa8] sm:$0xff]
    %v224 = vld [vmem:[#allocation6 + $0xb0] sm:$0xff]
    %v225 = vld [vmem:[#allocation6 + $0xb8] sm:$0xff]
    %v226 = vld [vmem:[#allocation6 + $0xc0] sm:$0xff]
    %v227 = vld [vmem:[#allocation6 + $0xc8] sm:$0xff]
    %v228 = vld [vmem:[#allocation6 + $0xd0] sm:$0xff]
    %v229 = vld [vmem:[#allocation6 + $0xd8] sm:$0xff]
    %v230 = vld [vmem:[#allocation6 + $0xe0] sm:$0xff]
    %v231 = vld [vmem:[#allocation6 + $0xe8] sm:$0xff]
    %v232 = vld [vmem:[#allocation6 + $0xf0] sm:$0xff]
    %v233 = vld [vmem:[#allocation6 + $0xf8] sm:$0xff]
    %v234 = vld [vmem:[#allocation6 + $0x100] sm:$0xff]
    %v235 = vld [vmem:[#allocation6 + $0x108] sm:$0xff]
    %v236 = vld [vmem:[#allocation6 + $0x110] sm:$0xff]
    %v237 = vld [vmem:[#allocation6 + $0x118] sm:$0xff]
    %v238 = vld [vmem:[#allocation6 + $0x120] sm:$0xff]
    %v239 = vld [vmem:[#allocation6 + $0x128] sm:$0xff]
    %v240 = vld [vmem:[#allocation6 + $0x130] sm:$0xff]
    %v241 = vld [vmem:[#allocation6 + $0x138] sm:$0xff]
    %v242 = vld [vmem:[#allocation6 + $0x140] sm:$0xff]
    %v243 = vld [vmem:[#allocation6 + $0x148] sm:$0xff]
    %v244 = vld [vmem:[#allocation6 + $0x150] sm:$0xff]
    %v245 = vld [vmem:[#allocation6 + $0x158] sm:$0xff]
    %v246 = vld [vmem:[#allocation6 + $0x160] sm:$0xff]
    %v247 = vld [vmem:[#allocation6 + $0x168] sm:$0xff]
    %v248 = vld [vmem:[#allocation6 + $0x170] sm:$0xff]
    %v249 = vld [vmem:[#allocation6 + $0x178] sm:$0xff]
    %v250 = vld [vmem:[#allocation6 + $0x180] sm:$0xff]
    %v251 = vld [vmem:[#allocation6 + $0x188] sm:$0xff]
    %v252 = vld [vmem:[#allocation6 + $0x190] sm:$0xff]
    %v253 = vld [vmem:[#allocation6 + $0x198] sm:$0xff]
    %v254 = vld [vmem:[#allocation6 + $0x1a0] sm:$0xff]
    %v255 = vld [vmem:[#allocation6 + $0x1a8] sm:$0xff]
    %v256 = vld [vmem:[#allocation6 + $0x1b0] sm:$0xff]
    %v257 = vld [vmem:[#allocation6 + $0x1b8] sm:$0xff]
    %v258 = vld [vmem:[#allocation6 + $0x1c0] sm:$0xff]
    %v259 = vld [vmem:[#allocation6 + $0x1c8] sm:$0xff]
    %v260 = vld [vmem:[#allocation6 + $0x1d0] sm:$0xff]
    %v261 = vld [vmem:[#allocation6 + $0x1d8] sm:$0xff]
    %v262 = vld [vmem:[#allocation6 + $0x1e0] sm:$0xff]
    %v263 = vld [vmem:[#allocation6 + $0x1e8] sm:$0xff]
    %v264 = vld [vmem:[#allocation6 + $0x1f0] sm:$0xff]
    %v265 = vld [vmem:[#allocation6 + $0x1f8] sm:$0xff]
    %v266 = vld [vmem:[#allocation6 + $0x200] sm:$0xff]
    %v267 = vld [vmem:[#allocation6 + $0x208] sm:$0xff]
    %v268 = vld [vmem:[#allocation6 + $0x210] sm:$0xff]
    %v269 = vld [vmem:[#allocation6 + $0x218] sm:$0xff]
    %v270 = vld [vmem:[#allocation6 + $0x220] sm:$0xff]
    %v271 = vld [vmem:[#allocation6 + $0x228] sm:$0xff]
    %v272 = vld [vmem:[#allocation6 + $0x230] sm:$0xff]
    %v273 = vld [vmem:[#allocation6 + $0x238] sm:$0xff]
    %v274 = vld [vmem:[#allocation6 + $0x240] sm:$0xff]
    %v275 = vld [vmem:[#allocation6 + $0x248] sm:$0xff]
    %v276 = vld [vmem:[#allocation6 + $0x250] sm:$0xff]
    %v277 = vld [vmem:[#allocation6 + $0x258] sm:$0xff]
    %v278 = vld [vmem:[#allocation6 + $0x260] sm:$0xff]
    %v279 = vld [vmem:[#allocation6 + $0x268] sm:$0xff]
    %v280 = vld [vmem:[#allocation6 + $0x270] sm:$0xff]
    %v281 = vld [vmem:[#allocation6 + $0x278] sm:$0xff]
    %v282 = vld [vmem:[#allocation6 + $0x280] sm:$0xff]
    %v283 = vld [vmem:[#allocation6 + $0x288] sm:$0xff]
    %v284 = vld [vmem:[#allocation6 + $0x290] sm:$0xff]
    %v285 = vld [vmem:[#allocation6 + $0x298] sm:$0xff]
    %v286 = vld [vmem:[#allocation6 + $0x2a0] sm:$0xff]
    %v287 = vld [vmem:[#allocation6 + $0x2a8] sm:$0xff]
    %v288 = vld [vmem:[#allocation6 + $0x2b0] sm:$0xff]
    %v289 = vld [vmem:[#allocation6 + $0x2b8] sm:$0xff]
    %v290 = vld [vmem:[#allocation6 + $0x2c0] sm:$0xff]
    %v291 = vld [vmem:[#allocation6 + $0x2c8] sm:$0xff]
    %v292 = vld [vmem:[#allocation6 + $0x2d0] sm:$0xff]
    %v293 = vld [vmem:[#allocation6 + $0x2d8] sm:$0xff]
    %v294 = vld [vmem:[#allocation6 + $0x2e0] sm:$0xff]
    %v295 = vld [vmem:[#allocation6 + $0x2e8] sm:$0xff]
    %v296 = vld [vmem:[#allocation6 + $0x2f0] sm:$0xff]
    %v297 = vld [vmem:[#allocation6 + $0x2f8] sm:$0xff]
    %v298 = vld [vmem:[#allocation6 + $0x300] sm:$0xff]
    %v299 = vld [vmem:[#allocation6 + $0x308] sm:$0xff]
    %v300 = vld [vmem:[#allocation6 + $0x310] sm:$0xff]
    %v301 = vld [vmem:[#allocation6 + $0x318] sm:$0xff]
    %v302 = vld [vmem:[#allocation6 + $0x320] sm:$0xff]
    %v303 = vld [vmem:[#allocation6 + $0x328] sm:$0xff]
    %v304 = vld [vmem:[#allocation6 + $0x330] sm:$0xff]
    %v305 = vld [vmem:[#allocation6 + $0x338] sm:$0xff]
    %v306 = vld [vmem:[#allocation6 + $0x340] sm:$0xff]
    %v307 = vld [vmem:[#allocation6 + $0x348] sm:$0xff]
    %v308 = vld [vmem:[#allocation6 + $0x350] sm:$0xff]
    %v309 = vld [vmem:[#allocation6 + $0x358] sm:$0xff]
    %v310 = vld [vmem:[#allocation6 + $0x360] sm:$0xff]
    %v311 = vld [vmem:[#allocation6 + $0x368] sm:$0xff]
    %v312 = vld [vmem:[#allocation6 + $0x370] sm:$0xff]
    %v313 = vld [vmem:[#allocation6 + $0x378] sm:$0xff]
    %v314 = vld [vmem:[#allocation6 + $0x380] sm:$0xff]
    %v315 = vld [vmem:[#allocation6 + $0x388] sm:$0xff]
    %v316 = vld [vmem:[#allocation6 + $0x390] sm:$0xff]
    %v317 = vld [vmem:[#allocation6 + $0x398] sm:$0xff]
    %v318 = vld [vmem:[#allocation6 + $0x3a0] sm:$0xff]
    %v319 = vld [vmem:[#allocation6 + $0x3a8] sm:$0xff]
    %v320 = vld [vmem:[#allocation6 + $0x3b0] sm:$0xff]
    %v321 = vld [vmem:[#allocation6 + $0x3b8] sm:$0xff]
    %v322 = vld [vmem:[#allocation6 + $0x3c0] sm:$0xff]
    %v323 = vld [vmem:[#allocation6 + $0x3c8] sm:$0xff]
    %v324 = vld [vmem:[#allocation6 + $0x3d0] sm:$0xff]
    %v325 = vld [vmem:[#allocation6 + $0x3d8] sm:$0xff]
    %v326 = vld [vmem:[#allocation6 + $0x3e0] sm:$0xff]
    %v327 = vld [vmem:[#allocation6 + $0x3e8] sm:$0xff]
    %v328 = vld [vmem:[#allocation6 + $0x3f0] sm:$0xff]
    %v329 = vld [vmem:[#allocation6 + $0x3f8] sm:$0xff]
    %v330 = vld [vmem:[#allocation2] sm:$0xff]
    %v331 = vld [vmem:[#allocation2 + $0x8] sm:$0xff]
    %v332 = vld [vmem:[#allocation2 + $0x10] sm:$0xff]
    %v333 = vld [vmem:[#allocation2 + $0x18] sm:$0xff]
    %v334 = vadd.f32 %v74, %v82
    %v335 = vadd.f32 %v334, %v90
    %v336 = vadd.f32 %v335, %v98
    %v337 = vrot.slane %v336, 4
    %v338 = vadd.f32 %v336, %v337
    %v339 = vrot.slane %v338, 2
    %v340 = vadd.f32 %v338, %v339
    %v341 = vrot.slane %v340, 1
    %v342 = vadd.f32 %v340, %v341
    %v343 = vadd.f32 %v75, %v83
    %v344 = vadd.f32 %v343, %v91
    %v345 = vadd.f32 %v344, %v99
    %v346 = vrot.slane %v345, 4
    %v347 = vadd.f32 %v345, %v346
    %v348 = vrot.slane %v347, 2
    %v349 = vadd.f32 %v347, %v348
    %v350 = vrot.slane %v349, 1
    %v351 = vadd.f32 %v349, %v350
    %v352 = vadd.f32 %v76, %v84
    %v353 = vadd.f32 %v352, %v92
    %v354 = vadd.f32 %v353, %v100
    %v355 = vrot.slane %v354, 4
    %v356 = vadd.f32 %v354, %v355
    %v357 = vrot.slane %v356, 2
    %v358 = vadd.f32 %v356, %v357
    %v359 = vrot.slane %v358, 1
    %v360 = vadd.f32 %v358, %v359
    %v361 = vadd.f32 %v77, %v85
    %v362 = vadd.f32 %v361, %v93
    %v363 = vadd.f32 %v362, %v101
    %v364 = vrot.slane %v363, 4
    %v365 = vadd.f32 %v363, %v364
    %v366 = vrot.slane %v365, 2
    %v367 = vadd.f32 %v365, %v366
    %v368 = vrot.slane %v367, 1
    %v369 = vadd.f32 %v367, %v368
    %v370 = vadd.f32 %v78, %v86
    %v371 = vadd.f32 %v370, %v94
    %v372 = vadd.f32 %v371, %v102
    %v373 = vrot.slane %v372, 4
    %v374 = vadd.f32 %v372, %v373
    %v375 = vrot.slane %v374, 2
    %v376 = vadd.f32 %v374, %v375
    %v377 = vrot.slane %v376, 1
    %v378 = vadd.f32 %v376, %v377
    %v379 = vadd.f32 %v79, %v87
    %v380 = vadd.f32 %v379, %v95
    %v381 = vadd.f32 %v380, %v103
    %v382 = vrot.slane %v381, 4
    %v383 = vadd.f32 %v381, %v382
    %v384 = vrot.slane %v383, 2
    %v385 = vadd.f32 %v383, %v384
    %v386 = vrot.slane %v385, 1
    %v387 = vadd.f32 %v385, %v386
    %v388 = vadd.f32 %v80, %v88
    %v389 = vadd.f32 %v388, %v96
    %v390 = vadd.f32 %v389, %v104
    %v391 = vrot.slane %v390, 4
    %v392 = vadd.f32 %v390, %v391
    %v393 = vrot.slane %v392, 2
    %v394 = vadd.f32 %v392, %v393
    %v395 = vrot.slane %v394, 1
    %v396 = vadd.f32 %v394, %v395
    %v397 = vadd.f32 %v81, %v89
    %v398 = vadd.f32 %v397, %v97
    %v399 = vadd.f32 %v398, %v105
    %v400 = vrot.slane %v399, 4
    %v401 = vadd.f32 %v399, %v400
    %v402 = vrot.slane %v401, 2
    %v403 = vadd.f32 %v401, %v402
    %v404 = vrot.slane %v403, 1
    %v405 = vadd.f32 %v403, %v404
    %v406 = vadd.f32 %v106, %v114
    %v407 = vadd.f32 %v406, %v122
    %v408 = vadd.f32 %v407, %v130
    %v409 = vrot.slane %v408, 4
    %v410 = vadd.f32 %v408, %v409
    %v411 = vrot.slane %v410, 2
    %v412 = vadd.f32 %v410, %v411
    %v413 = vrot.slane %v412, 1
    %v414 = vadd.f32 %v412, %v413
    %v415 = vadd.f32 %v107, %v115
    %v416 = vadd.f32 %v415, %v123
    %v417 = vadd.f32 %v416, %v131
    %v418 = vrot.slane %v417, 4
    %v419 = vadd.f32 %v417, %v418
    %v420 = vrot.slane %v419, 2
    %v421 = vadd.f32 %v419, %v420
    %v422 = vrot.slane %v421, 1
    %v423 = vadd.f32 %v421, %v422
    %v424 = vadd.f32 %v108, %v116
    %v425 = vadd.f32 %v424, %v124
    %v426 = vadd.f32 %v425, %v132
    %v427 = vrot.slane %v426, 4
    %v428 = vadd.f32 %v426, %v427
    %v429 = vrot.slane %v428, 2
    %v430 = vadd.f32 %v428, %v429
    %v431 = vrot.slane %v430, 1
    %v432 = vadd.f32 %v430, %v431
    %v433 = vadd.f32 %v109, %v117
    %v434 = vadd.f32 %v433, %v125
    %v435 = vadd.f32 %v434, %v133
    %v436 = vrot.slane %v435, 4
    %v437 = vadd.f32 %v435, %v436
    %v438 = vrot.slane %v437, 2
    %v439 = vadd.f32 %v437, %v438
    %v440 = vrot.slane %v439, 1
    %v441 = vadd.f32 %v439, %v440
    %v442 = vadd.f32 %v110, %v118
    %v443 = vadd.f32 %v442, %v126
    %v444 = vadd.f32 %v443, %v134
    %v445 = vrot.slane %v444, 4
    %v446 = vadd.f32 %v444, %v445
    %v447 = vrot.slane %v446, 2
    %v448 = vadd.f32 %v446, %v447
    %v449 = vrot.slane %v448, 1
    %v450 = vadd.f32 %v448, %v449
    %v451 = vadd.f32 %v111, %v119
    %v452 = vadd.f32 %v451, %v127
    %v453 = vadd.f32 %v452, %v135
    %v454 = vrot.slane %v453, 4
    %v455 = vadd.f32 %v453, %v454
    %v456 = vrot.slane %v455, 2
    %v457 = vadd.f32 %v455, %v456
    %v458 = vrot.slane %v457, 1
    %v459 = vadd.f32 %v457, %v458
    %v460 = vadd.f32 %v112, %v120
    %v461 = vadd.f32 %v460, %v128
    %v462 = vadd.f32 %v461, %v136
    %v463 = vrot.slane %v462, 4
    %v464 = vadd.f32 %v462, %v463
    %v465 = vrot.slane %v464, 2
    %v466 = vadd.f32 %v464, %v465
    %v467 = vrot.slane %v466, 1
    %v468 = vadd.f32 %v466, %v467
    %v469 = vadd.f32 %v113, %v121
    %v470 = vadd.f32 %v469, %v129
    %v471 = vadd.f32 %v470, %v137
    %v472 = vrot.slane %v471, 4
    %v473 = vadd.f32 %v471, %v472
    %v474 = vrot.slane %v473, 2
    %v475 = vadd.f32 %v473, %v474
    %v476 = vrot.slane %v475, 1
    %v477 = vadd.f32 %v475, %v476
    %v478 = vadd.f32 %v138, %v146
    %v479 = vadd.f32 %v478, %v154
    %v480 = vadd.f32 %v479, %v162
    %v481 = vrot.slane %v480, 4
    %v482 = vadd.f32 %v480, %v481
    %v483 = vrot.slane %v482, 2
    %v484 = vadd.f32 %v482, %v483
    %v485 = vrot.slane %v484, 1
    %v486 = vadd.f32 %v484, %v485
    %v487 = vadd.f32 %v139, %v147
    %v488 = vadd.f32 %v487, %v155
    %v489 = vadd.f32 %v488, %v163
    %v490 = vrot.slane %v489, 4
    %v491 = vadd.f32 %v489, %v490
    %v492 = vrot.slane %v491, 2
    %v493 = vadd.f32 %v491, %v492
    %v494 = vrot.slane %v493, 1
    %v495 = vadd.f32 %v493, %v494
    %v496 = vadd.f32 %v140, %v148
    %v497 = vadd.f32 %v496, %v156
    %v498 = vadd.f32 %v497, %v164
    %v499 = vrot.slane %v498, 4
    %v500 = vadd.f32 %v498, %v499
    %v501 = vrot.slane %v500, 2
    %v502 = vadd.f32 %v500, %v501
    %v503 = vrot.slane %v502, 1
    %v504 = vadd.f32 %v502, %v503
    %v505 = vadd.f32 %v141, %v149
    %v506 = vadd.f32 %v505, %v157
    %v507 = vadd.f32 %v506, %v165
    %v508 = vrot.slane %v507, 4
    %v509 = vadd.f32 %v507, %v508
    %v510 = vrot.slane %v509, 2
    %v511 = vadd.f32 %v509, %v510
    %v512 = vrot.slane %v511, 1
    %v513 = vadd.f32 %v511, %v512
    %v514 = vadd.f32 %v142, %v150
    %v515 = vadd.f32 %v514, %v158
    %v516 = vadd.f32 %v515, %v166
    %v517 = vrot.slane %v516, 4
    %v518 = vadd.f32 %v516, %v517
    %v519 = vrot.slane %v518, 2
    %v520 = vadd.f32 %v518, %v519
    %v521 = vrot.slane %v520, 1
    %v522 = vadd.f32 %v520, %v521
    %v523 = vadd.f32 %v143, %v151
    %v524 = vadd.f32 %v523, %v159
    %v525 = vadd.f32 %v524, %v167
    %v526 = vrot.slane %v525, 4
    %v527 = vadd.f32 %v525, %v526
    %v528 = vrot.slane %v527, 2
    %v529 = vadd.f32 %v527, %v528
    %v530 = vrot.slane %v529, 1
    %v531 = vadd.f32 %v529, %v530
    %v532 = vadd.f32 %v144, %v152
    %v533 = vadd.f32 %v532, %v160
    %v534 = vadd.f32 %v533, %v168
    %v535 = vrot.slane %v534, 4
    %v536 = vadd.f32 %v534, %v535
    %v537 = vrot.slane %v536, 2
    %v538 = vadd.f32 %v536, %v537
    %v539 = vrot.slane %v538, 1
    %v540 = vadd.f32 %v538, %v539
    %v541 = vadd.f32 %v145, %v153
    %v542 = vadd.f32 %v541, %v161
    %v543 = vadd.f32 %v542, %v169
    %v544 = vrot.slane %v543, 4
    %v545 = vadd.f32 %v543, %v544
    %v546 = vrot.slane %v545, 2
    %v547 = vadd.f32 %v545, %v546
    %v548 = vrot.slane %v547, 1
    %v549 = vadd.f32 %v547, %v548
    %v550 = vadd.f32 %v170, %v178
    %v551 = vadd.f32 %v550, %v186
    %v552 = vadd.f32 %v551, %v194
    %v553 = vrot.slane %v552, 4
    %v554 = vadd.f32 %v552, %v553
    %v555 = vrot.slane %v554, 2
    %v556 = vadd.f32 %v554, %v555
    %v557 = vrot.slane %v556, 1
    %v558 = vadd.f32 %v556, %v557
    %v559 = vadd.f32 %v171, %v179
    %v560 = vadd.f32 %v559, %v187
    %v561 = vadd.f32 %v560, %v195
    %v562 = vrot.slane %v561, 4
    %v563 = vadd.f32 %v561, %v562
    %v564 = vrot.slane %v563, 2
    %v565 = vadd.f32 %v563, %v564
    %v566 = vrot.slane %v565, 1
    %v567 = vadd.f32 %v565, %v566
    %v568 = vadd.f32 %v172, %v180
    %v569 = vadd.f32 %v568, %v188
    %v570 = vadd.f32 %v569, %v196
    %v571 = vrot.slane %v570, 4
    %v572 = vadd.f32 %v570, %v571
    %v573 = vrot.slane %v572, 2
    %v574 = vadd.f32 %v572, %v573
    %v575 = vrot.slane %v574, 1
    %v576 = vadd.f32 %v574, %v575
    %v577 = vadd.f32 %v173, %v181
    %v578 = vadd.f32 %v577, %v189
    %v579 = vadd.f32 %v578, %v197
    %v580 = vrot.slane %v579, 4
    %v581 = vadd.f32 %v579, %v580
    %v582 = vrot.slane %v581, 2
    %v583 = vadd.f32 %v581, %v582
    %v584 = vrot.slane %v583, 1
    %v585 = vadd.f32 %v583, %v584
    %v586 = vadd.f32 %v174, %v182
    %v587 = vadd.f32 %v586, %v190
    %v588 = vadd.f32 %v587, %v198
    %v589 = vrot.slane %v588, 4
    %v590 = vadd.f32 %v588, %v589
    %v591 = vrot.slane %v590, 2
    %v592 = vadd.f32 %v590, %v591
    %v593 = vrot.slane %v592, 1
    %v594 = vadd.f32 %v592, %v593
    %v595 = vadd.f32 %v175, %v183
    %v596 = vadd.f32 %v595, %v191
    %v597 = vadd.f32 %v596, %v199
    %v598 = vrot.slane %v597, 4
    %v599 = vadd.f32 %v597, %v598
    %v600 = vrot.slane %v599, 2
    %v601 = vadd.f32 %v599, %v600
    %v602 = vrot.slane %v601, 1
    %v603 = vadd.f32 %v601, %v602
    %v604 = vadd.f32 %v176, %v184
    %v605 = vadd.f32 %v604, %v192
    %v606 = vadd.f32 %v605, %v200
    %v607 = vrot.slane %v606, 4
    %v608 = vadd.f32 %v606, %v607
    %v609 = vrot.slane %v608, 2
    %v610 = vadd.f32 %v608, %v609
    %v611 = vrot.slane %v610, 1
    %v612 = vadd.f32 %v610, %v611
    %v613 = vadd.f32 %v177, %v185
    %v614 = vadd.f32 %v613, %v193
    %v615 = vadd.f32 %v614, %v201
    %v616 = vrot.slane %v615, 4
    %v617 = vadd.f32 %v615, %v616
    %v618 = vrot.slane %v617, 2
    %v619 = vadd.f32 %v617, %v618
    %v620 = vrot.slane %v619, 1
    %v621 = vadd.f32 %v619, %v620
    %v654 = vcombine.low %v342, %v351
    %v655 = vcombine.low %v360, %v369
    %v656 = vcombine.low %v378, %v387
    %v657 = vcombine.low %v396, %v405
    %v658 = vcombine.low %v414, %v423
    %v659 = vcombine.low %v432, %v441
    %v660 = vcombine.low %v450, %v459
    %v661 = vcombine.low %v468, %v477
    %v662 = vcombine.low %v486, %v495
    %v663 = vcombine.low %v504, %v513
    %v664 = vcombine.low %v522, %v531
    %v665 = vcombine.low %v540, %v549
    %v666 = vcombine.low %v558, %v567
    %v667 = vcombine.low %v576, %v585
    %v668 = vcombine.low %v594, %v603
    %v669 = vcombine.low %v612, %v621
    %v670 = vrot.slane %v658, 7
    %vm671 = vcmask 1041409
    %v672 = vsel %vm671, %v670, %v654
    %vm673 = vcmask 1045509
    %v674 = vsel %vm673, %v670, %v672
    %v675 = vrot.slane %v662, 6
    %vm676 = vcmask 1042434
    %v677 = vsel %vm676, %v675, %v674
    %vm678 = vcmask 1046534
    %v679 = vsel %vm678, %v675, %v677
    %v680 = vrot.slane %v666, 5
    %vm681 = vcmask 1043459
    %v682 = vsel %vm681, %v680, %v679
    %vm683 = vcmask 1047559
    %v684 = vsel %vm683, %v680, %v682
    %v685 = vrot.slane %v659, 7
    %v686 = vsel %vm671, %v685, %v655
    %v687 = vsel %vm673, %v685, %v686
    %v688 = vrot.slane %v663, 6
    %v689 = vsel %vm676, %v688, %v687
    %v690 = vsel %vm678, %v688, %v689
    %v691 = vrot.slane %v667, 5
    %v692 = vsel %vm681, %v691, %v690
    %v693 = vsel %vm683, %v691, %v692
    %v694 = vrot.slane %v660, 7
    %v695 = vsel %vm671, %v694, %v656
    %v696 = vsel %vm673, %v694, %v695
    %v697 = vrot.slane %v664, 6
    %v698 = vsel %vm676, %v697, %v696
    %v699 = vsel %vm678, %v697, %v698
    %v700 = vrot.slane %v668, 5
    %v701 = vsel %vm681, %v700, %v699
    %v702 = vsel %vm683, %v700, %v701
    %v703 = vrot.slane %v661, 7
    %v704 = vsel %vm671, %v703, %v657
    %v705 = vsel %vm673, %v703, %v704
    %v706 = vrot.slane %v665, 6
    %v707 = vsel %vm676, %v706, %v705
    %v708 = vsel %vm678, %v706, %v707
    %v709 = vrot.slane %v669, 5
    %v710 = vsel %vm681, %v709, %v708
    %v711 = vsel %vm683, %v709, %v710
    %v716 = vadd.f32 %v330, %v684
    %v717 = vadd.f32 %v331, %v693
    %v718 = vadd.f32 %v332, %v702
    %v719 = vadd.f32 %v333, %v711
    %720 = vst [vmem:[#allocation2] sm:$0xff] %v716
    %721 = vst [vmem:[#allocation2 + $0x8] sm:$0xff] %v717
    %722 = vst [vmem:[#allocation2 + $0x10] sm:$0xff] %v718
    %723 = vst [vmem:[#allocation2 + $0x18] sm:$0xff] %v719
    %v724 = vld [vmem:[#allocation2 + $0x20] sm:$0xff]
    %v725 = vld [vmem:[#allocation2 + $0x28] sm:$0xff]
    %v726 = vld [vmem:[#allocation2 + $0x30] sm:$0xff]
    %v727 = vld [vmem:[#allocation2 + $0x38] sm:$0xff]
    %v728 = vadd.f32 %v202, %v210
    %v729 = vadd.f32 %v728, %v218
    %v730 = vadd.f32 %v729, %v226
    %v731 = vrot.slane %v730, 4
    %v732 = vadd.f32 %v730, %v731
    %v733 = vrot.slane %v732, 2
    %v734 = vadd.f32 %v732, %v733
    %v735 = vrot.slane %v734, 1
    %v736 = vadd.f32 %v734, %v735
    %v737 = vadd.f32 %v203, %v211
    %v738 = vadd.f32 %v737, %v219
    %v739 = vadd.f32 %v738, %v227
    %v740 = vrot.slane %v739, 4
    %v741 = vadd.f32 %v739, %v740
    %v742 = vrot.slane %v741, 2
    %v743 = vadd.f32 %v741, %v742
    %v744 = vrot.slane %v743, 1
    %v745 = vadd.f32 %v743, %v744
    %v746 = vadd.f32 %v204, %v212
    %v747 = vadd.f32 %v746, %v220
    %v748 = vadd.f32 %v747, %v228
    %v749 = vrot.slane %v748, 4
    %v750 = vadd.f32 %v748, %v749
    %v751 = vrot.slane %v750, 2
    %v752 = vadd.f32 %v750, %v751
    %v753 = vrot.slane %v752, 1
    %v754 = vadd.f32 %v752, %v753
    %v755 = vadd.f32 %v205, %v213
    %v756 = vadd.f32 %v755, %v221
    %v757 = vadd.f32 %v756, %v229
    %v758 = vrot.slane %v757, 4
    %v759 = vadd.f32 %v757, %v758
    %v760 = vrot.slane %v759, 2
    %v761 = vadd.f32 %v759, %v760
    %v762 = vrot.slane %v761, 1
    %v763 = vadd.f32 %v761, %v762
    %v764 = vadd.f32 %v206, %v214
    %v765 = vadd.f32 %v764, %v222
    %v766 = vadd.f32 %v765, %v230
    %v767 = vrot.slane %v766, 4
    %v768 = vadd.f32 %v766, %v767
    %v769 = vrot.slane %v768, 2
    %v770 = vadd.f32 %v768, %v769
    %v771 = vrot.slane %v770, 1
    %v772 = vadd.f32 %v770, %v771
    %v773 = vadd.f32 %v207, %v215
    %v774 = vadd.f32 %v773, %v223
    %v775 = vadd.f32 %v774, %v231
    %v776 = vrot.slane %v775, 4
    %v777 = vadd.f32 %v775, %v776
    %v778 = vrot.slane %v777, 2
    %v779 = vadd.f32 %v777, %v778
    %v780 = vrot.slane %v779, 1
    %v781 = vadd.f32 %v779, %v780
    %v782 = vadd.f32 %v208, %v216
    %v783 = vadd.f32 %v782, %v224
    %v784 = vadd.f32 %v783, %v232
    %v785 = vrot.slane %v784, 4
    %v786 = vadd.f32 %v784, %v785
    %v787 = vrot.slane %v786, 2
    %v788 = vadd.f32 %v786, %v787
    %v789 = vrot.slane %v788, 1
    %v790 = vadd.f32 %v788, %v789
    %v791 = vadd.f32 %v209, %v217
    %v792 = vadd.f32 %v791, %v225
    %v793 = vadd.f32 %v792, %v233
    %v794 = vrot.slane %v793, 4
    %v795 = vadd.f32 %v793, %v794
    %v796 = vrot.slane %v795, 2
    %v797 = vadd.f32 %v795, %v796
    %v798 = vrot.slane %v797, 1
    %v799 = vadd.f32 %v797, %v798
    %v800 = vadd.f32 %v234, %v242
    %v801 = vadd.f32 %v800, %v250
    %v802 = vadd.f32 %v801, %v258
    %v803 = vrot.slane %v802, 4
    %v804 = vadd.f32 %v802, %v803
    %v805 = vrot.slane %v804, 2
    %v806 = vadd.f32 %v804, %v805
    %v807 = vrot.slane %v806, 1
    %v808 = vadd.f32 %v806, %v807
    %v809 = vadd.f32 %v235, %v243
    %v810 = vadd.f32 %v809, %v251
    %v811 = vadd.f32 %v810, %v259
    %v812 = vrot.slane %v811, 4
    %v813 = vadd.f32 %v811, %v812
    %v814 = vrot.slane %v813, 2
    %v815 = vadd.f32 %v813, %v814
    %v816 = vrot.slane %v815, 1
    %v817 = vadd.f32 %v815, %v816
    %v818 = vadd.f32 %v236, %v244
    %v819 = vadd.f32 %v818, %v252
    %v820 = vadd.f32 %v819, %v260
    %v821 = vrot.slane %v820, 4
    %v822 = vadd.f32 %v820, %v821
    %v823 = vrot.slane %v822, 2
    %v824 = vadd.f32 %v822, %v823
    %v825 = vrot.slane %v824, 1
    %v826 = vadd.f32 %v824, %v825
    %v827 = vadd.f32 %v237, %v245
    %v828 = vadd.f32 %v827, %v253
    %v829 = vadd.f32 %v828, %v261
    %v830 = vrot.slane %v829, 4
    %v831 = vadd.f32 %v829, %v830
    %v832 = vrot.slane %v831, 2
    %v833 = vadd.f32 %v831, %v832
    %v834 = vrot.slane %v833, 1
    %v835 = vadd.f32 %v833, %v834
    %v836 = vadd.f32 %v238, %v246
    %v837 = vadd.f32 %v836, %v254
    %v838 = vadd.f32 %v837, %v262
    %v839 = vrot.slane %v838, 4
    %v840 = vadd.f32 %v838, %v839
    %v841 = vrot.slane %v840, 2
    %v842 = vadd.f32 %v840, %v841
    %v843 = vrot.slane %v842, 1
    %v844 = vadd.f32 %v842, %v843
    %v845 = vadd.f32 %v239, %v247
    %v846 = vadd.f32 %v845, %v255
    %v847 = vadd.f32 %v846, %v263
    %v848 = vrot.slane %v847, 4
    %v849 = vadd.f32 %v847, %v848
    %v850 = vrot.slane %v849, 2
    %v851 = vadd.f32 %v849, %v850
    %v852 = vrot.slane %v851, 1
    %v853 = vadd.f32 %v851, %v852
    %v854 = vadd.f32 %v240, %v248
    %v855 = vadd.f32 %v854, %v256
    %v856 = vadd.f32 %v855, %v264
    %v857 = vrot.slane %v856, 4
    %v858 = vadd.f32 %v856, %v857
    %v859 = vrot.slane %v858, 2
    %v860 = vadd.f32 %v858, %v859
    %v861 = vrot.slane %v860, 1
    %v862 = vadd.f32 %v860, %v861
    %v863 = vadd.f32 %v241, %v249
    %v864 = vadd.f32 %v863, %v257
    %v865 = vadd.f32 %v864, %v265
    %v866 = vrot.slane %v865, 4
    %v867 = vadd.f32 %v865, %v866
    %v868 = vrot.slane %v867, 2
    %v869 = vadd.f32 %v867, %v868
    %v870 = vrot.slane %v869, 1
    %v871 = vadd.f32 %v869, %v870
    %v872 = vadd.f32 %v266, %v274
    %v873 = vadd.f32 %v872, %v282
    %v874 = vadd.f32 %v873, %v290
    %v875 = vrot.slane %v874, 4
    %v876 = vadd.f32 %v874, %v875
    %v877 = vrot.slane %v876, 2
    %v878 = vadd.f32 %v876, %v877
    %v879 = vrot.slane %v878, 1
    %v880 = vadd.f32 %v878, %v879
    %v881 = vadd.f32 %v267, %v275
    %v882 = vadd.f32 %v881, %v283
    %v883 = vadd.f32 %v882, %v291
    %v884 = vrot.slane %v883, 4
    %v885 = vadd.f32 %v883, %v884
    %v886 = vrot.slane %v885, 2
    %v887 = vadd.f32 %v885, %v886
    %v888 = vrot.slane %v887, 1
    %v889 = vadd.f32 %v887, %v888
    %v890 = vadd.f32 %v268, %v276
    %v891 = vadd.f32 %v890, %v284
    %v892 = vadd.f32 %v891, %v292
    %v893 = vrot.slane %v892, 4
    %v894 = vadd.f32 %v892, %v893
    %v895 = vrot.slane %v894, 2
    %v896 = vadd.f32 %v894, %v895
    %v897 = vrot.slane %v896, 1
    %v898 = vadd.f32 %v896, %v897
    %v899 = vadd.f32 %v269, %v277
    %v900 = vadd.f32 %v899, %v285
    %v901 = vadd.f32 %v900, %v293
    %v902 = vrot.slane %v901, 4
    %v903 = vadd.f32 %v901, %v902
    %v904 = vrot.slane %v903, 2
    %v905 = vadd.f32 %v903, %v904
    %v906 = vrot.slane %v905, 1
    %v907 = vadd.f32 %v905, %v906
    %v908 = vadd.f32 %v270, %v278
    %v909 = vadd.f32 %v908, %v286
    %v910 = vadd.f32 %v909, %v294
    %v911 = vrot.slane %v910, 4
    %v912 = vadd.f32 %v910, %v911
    %v913 = vrot.slane %v912, 2
    %v914 = vadd.f32 %v912, %v913
    %v915 = vrot.slane %v914, 1
    %v916 = vadd.f32 %v914, %v915
    %v917 = vadd.f32 %v271, %v279
    %v918 = vadd.f32 %v917, %v287
    %v919 = vadd.f32 %v918, %v295
    %v920 = vrot.slane %v919, 4
    %v921 = vadd.f32 %v919, %v920
    %v922 = vrot.slane %v921, 2
    %v923 = vadd.f32 %v921, %v922
    %v924 = vrot.slane %v923, 1
    %v925 = vadd.f32 %v923, %v924
    %v926 = vadd.f32 %v272, %v280
    %v927 = vadd.f32 %v926, %v288
    %v928 = vadd.f32 %v927, %v296
    %v929 = vrot.slane %v928, 4
    %v930 = vadd.f32 %v928, %v929
    %v931 = vrot.slane %v930, 2
    %v932 = vadd.f32 %v930, %v931
    %v933 = vrot.slane %v932, 1
    %v934 = vadd.f32 %v932, %v933
    %v935 = vadd.f32 %v273, %v281
    %v936 = vadd.f32 %v935, %v289
    %v937 = vadd.f32 %v936, %v297
    %v938 = vrot.slane %v937, 4
    %v939 = vadd.f32 %v937, %v938
    %v940 = vrot.slane %v939, 2
    %v941 = vadd.f32 %v939, %v940
    %v942 = vrot.slane %v941, 1
    %v943 = vadd.f32 %v941, %v942
    %v944 = vadd.f32 %v298, %v306
    %v945 = vadd.f32 %v944, %v314
    %v946 = vadd.f32 %v945, %v322
    %v947 = vrot.slane %v946, 4
    %v948 = vadd.f32 %v946, %v947
    %v949 = vrot.slane %v948, 2
    %v950 = vadd.f32 %v948, %v949
    %v951 = vrot.slane %v950, 1
    %v952 = vadd.f32 %v950, %v951
    %v953 = vadd.f32 %v299, %v307
    %v954 = vadd.f32 %v953, %v315
    %v955 = vadd.f32 %v954, %v323
    %v956 = vrot.slane %v955, 4
    %v957 = vadd.f32 %v955, %v956
    %v958 = vrot.slane %v957, 2
    %v959 = vadd.f32 %v957, %v958
    %v960 = vrot.slane %v959, 1
    %v961 = vadd.f32 %v959, %v960
    %v962 = vadd.f32 %v300, %v308
    %v963 = vadd.f32 %v962, %v316
    %v964 = vadd.f32 %v963, %v324
    %v965 = vrot.slane %v964, 4
    %v966 = vadd.f32 %v964, %v965
    %v967 = vrot.slane %v966, 2
    %v968 = vadd.f32 %v966, %v967
    %v969 = vrot.slane %v968, 1
    %v970 = vadd.f32 %v968, %v969
    %v971 = vadd.f32 %v301, %v309
    %v972 = vadd.f32 %v971, %v317
    %v973 = vadd.f32 %v972, %v325
    %v974 = vrot.slane %v973, 4
    %v975 = vadd.f32 %v973, %v974
    %v976 = vrot.slane %v975, 2
    %v977 = vadd.f32 %v975, %v976
    %v978 = vrot.slane %v977, 1
    %v979 = vadd.f32 %v977, %v978
    %v980 = vadd.f32 %v302, %v310
    %v981 = vadd.f32 %v980, %v318
    %v982 = vadd.f32 %v981, %v326
    %v983 = vrot.slane %v982, 4
    %v984 = vadd.f32 %v982, %v983
    %v985 = vrot.slane %v984, 2
    %v986 = vadd.f32 %v984, %v985
    %v987 = vrot.slane %v986, 1
    %v988 = vadd.f32 %v986, %v987
    %v989 = vadd.f32 %v303, %v311
    %v990 = vadd.f32 %v989, %v319
    %v991 = vadd.f32 %v990, %v327
    %v992 = vrot.slane %v991, 4
    %v993 = vadd.f32 %v991, %v992
    %v994 = vrot.slane %v993, 2
    %v995 = vadd.f32 %v993, %v994
    %v996 = vrot.slane %v995, 1
    %v997 = vadd.f32 %v995, %v996
    %v998 = vadd.f32 %v304, %v312
    %v999 = vadd.f32 %v998, %v320
    %v1000 = vadd.f32 %v999, %v328
    %v1001 = vrot.slane %v1000, 4
    %v1002 = vadd.f32 %v1000, %v1001
    %v1003 = vrot.slane %v1002, 2
    %v1004 = vadd.f32 %v1002, %v1003
    %v1005 = vrot.slane %v1004, 1
    %v1006 = vadd.f32 %v1004, %v1005
    %v1007 = vadd.f32 %v305, %v313
    %v1008 = vadd.f32 %v1007, %v321
    %v1009 = vadd.f32 %v1008, %v329
    %v1010 = vrot.slane %v1009, 4
    %v1011 = vadd.f32 %v1009, %v1010
    %v1012 = vrot.slane %v1011, 2
    %v1013 = vadd.f32 %v1011, %v1012
    %v1014 = vrot.slane %v1013, 1
    %v1015 = vadd.f32 %v1013, %v1014
    %v1048 = vcombine.low %v736, %v745
    %v1049 = vcombine.low %v754, %v763
    %v1050 = vcombine.low %v772, %v781
    %v1051 = vcombine.low %v790, %v799
    %v1052 = vcombine.low %v808, %v817
    %v1053 = vcombine.low %v826, %v835
    %v1054 = vcombine.low %v844, %v853
    %v1055 = vcombine.low %v862, %v871
    %v1056 = vcombine.low %v880, %v889
    %v1057 = vcombine.low %v898, %v907
    %v1058 = vcombine.low %v916, %v925
    %v1059 = vcombine.low %v934, %v943
    %v1060 = vcombine.low %v952, %v961
    %v1061 = vcombine.low %v970, %v979
    %v1062 = vcombine.low %v988, %v997
    %v1063 = vcombine.low %v1006, %v1015
    %v1064 = vrot.slane %v1052, 7
    %v1065 = vsel %vm671, %v1064, %v1048
    %v1066 = vsel %vm673, %v1064, %v1065
    %v1067 = vrot.slane %v1056, 6
    %v1068 = vsel %vm676, %v1067, %v1066
    %v1069 = vsel %vm678, %v1067, %v1068
    %v1070 = vrot.slane %v1060, 5
    %v1071 = vsel %vm681, %v1070, %v1069
    %v1072 = vsel %vm683, %v1070, %v1071
    %v1073 = vrot.slane %v1053, 7
    %v1074 = vsel %vm671, %v1073, %v1049
    %v1075 = vsel %vm673, %v1073, %v1074
    %v1076 = vrot.slane %v1057, 6
    %v1077 = vsel %vm676, %v1076, %v1075
    %v1078 = vsel %vm678, %v1076, %v1077
    %v1079 = vrot.slane %v1061, 5
    %v1080 = vsel %vm681, %v1079, %v1078
    %v1081 = vsel %vm683, %v1079, %v1080
    %v1082 = vrot.slane %v1054, 7
    %v1083 = vsel %vm671, %v1082, %v1050
    %v1084 = vsel %vm673, %v1082, %v1083
    %v1085 = vrot.slane %v1058, 6
    %v1086 = vsel %vm676, %v1085, %v1084
    %v1087 = vsel %vm678, %v1085, %v1086
    %v1088 = vrot.slane %v1062, 5
    %v1089 = vsel %vm681, %v1088, %v1087
    %v1090 = vsel %vm683, %v1088, %v1089
    %v1091 = vrot.slane %v1055, 7
    %v1092 = vsel %vm671, %v1091, %v1051
    %v1093 = vsel %vm673, %v1091, %v1092
    %v1094 = vrot.slane %v1059, 6
    %v1095 = vsel %vm676, %v1094, %v1093
    %v1096 = vsel %vm678, %v1094, %v1095
    %v1097 = vrot.slane %v1063, 5
    %v1098 = vsel %vm681, %v1097, %v1096
    %v1099 = vsel %vm683, %v1097, %v1098
    %v1104 = vadd.f32 %v724, %v1072
    %v1105 = vadd.f32 %v725, %v1081
    %v1106 = vadd.f32 %v726, %v1090
    %v1107 = vadd.f32 %v727, %v1099
    %1108 = vst [vmem:[#allocation2 + $0x20] sm:$0xff] %v1104
    %1109 = vst [vmem:[#allocation2 + $0x28] sm:$0xff] %v1105
    %1110 = vst [vmem:[#allocation2 + $0x30] sm:$0xff] %v1106
    %1111 = vst [vmem:[#allocation2 + $0x38] sm:$0xff] %v1107
    // Predicated region
    $region38: #{tpu_custom_call.1} parent=1 // pred_check
      %p1112 = pneg %p62
    $region39: #{tpu_custom_call.1} parent=1 // pred_check_branch
      %1114 = sbr.rel (%p1112) target = $region41
    $region40: #{tpu_custom_call.1} parent=1 // pred_region
      %v1115 = vld [vmem:[#allocation2] sm:$0xff]
      %v1116 = vld [vmem:[#allocation2 + $0x8] sm:$0xff]
      %v1117 = vld [vmem:[#allocation2 + $0x10] sm:$0xff]
      %v1118 = vld [vmem:[#allocation2 + $0x18] sm:$0xff]
      %v1119 = vld [vmem:[#allocation2 + $0x20] sm:$0xff]
      %v1120 = vld [vmem:[#allocation2 + $0x28] sm:$0xff]
      %v1121 = vld [vmem:[#allocation2 + $0x30] sm:$0xff]
      %v1122 = vld [vmem:[#allocation2 + $0x38] sm:$0xff]
      %v1123 = vld [vmem:[%s0] sm:$0xf]
      %1125 = vset.pattern.permute.xlu0 0
      %1126 = vperm.xlu0 %1125, %v1123
      %v1127 = vpop.permute.xlu0 %1126
      %v1129 = vunpack.c.l.s4 839922192
      %v1130 = vunpack.c.0.s8 %v1129
      %v1131 = vlaneseq
      %v1132 = vshrl.u32 %v1131, 7
      %v1133 = vsub.s32 %v1130, %v1132
      %v1134 = vrot.slane %v1127, %v1133
      %v1136 = vmul.f32 %v1115, %v1134
      %v1137 = vmul.f32 %v1116, %v1134
      %v1138 = vmul.f32 %v1117, %v1134
      %v1139 = vmul.f32 %v1118, %v1134
      %v1140 = vmul.f32 %v1119, %v1134
      %v1141 = vmul.f32 %v1120, %v1134
      %v1142 = vmul.f32 %v1121, %v1134
      %v1143 = vmul.f32 %v1122, %v1134
      %v1144 = vld [vmem:[#allocation8] sm:$0xff]
      %v1145 = vld [vmem:[#allocation8 + $0x8] sm:$0xff]
      %v1146 = vld [vmem:[#allocation8 + $0x10] sm:$0xff]
      %v1147 = vld [vmem:[#allocation8 + $0x18] sm:$0xff]
      %v1148 = vld [vmem:[#allocation8 + $0x20] sm:$0xff]
      %v1149 = vld [vmem:[#allocation8 + $0x28] sm:$0xff]
      %v1150 = vld [vmem:[#allocation8 + $0x30] sm:$0xff]
      %v1151 = vld [vmem:[#allocation8 + $0x38] sm:$0xff]
      %v1152 = vld [vmem:[#allocation8 + $0x40] sm:$0xff]
      %v1153 = vld [vmem:[#allocation8 + $0x48] sm:$0xff]
      %v1154 = vld [vmem:[#allocation8 + $0x50] sm:$0xff]
      %v1155 = vld [vmem:[#allocation8 + $0x58] sm:$0xff]
      %v1156 = vld [vmem:[#allocation8 + $0x60] sm:$0xff]
      %v1157 = vld [vmem:[#allocation8 + $0x68] sm:$0xff]
      %v1158 = vld [vmem:[#allocation8 + $0x70] sm:$0xff]
      %v1159 = vld [vmem:[#allocation8 + $0x78] sm:$0xff]
      %v1160 = vld [vmem:[#allocation8 + $0x80] sm:$0xff]
      %v1161 = vld [vmem:[#allocation8 + $0x88] sm:$0xff]
      %v1162 = vld [vmem:[#allocation8 + $0x90] sm:$0xff]
      %v1163 = vld [vmem:[#allocation8 + $0x98] sm:$0xff]
      %v1164 = vld [vmem:[#allocation8 + $0xa0] sm:$0xff]
      %v1165 = vld [vmem:[#allocation8 + $0xa8] sm:$0xff]
      %v1166 = vld [vmem:[#allocation8 + $0xb0] sm:$0xff]
      %v1167 = vld [vmem:[#allocation8 + $0xb8] sm:$0xff]
      %v1168 = vld [vmem:[#allocation8 + $0xc0] sm:$0xff]
      %v1169 = vld [vmem:[#allocation8 + $0xc8] sm:$0xff]
      %v1170 = vld [vmem:[#allocation8 + $0xd0] sm:$0xff]
      %v1171 = vld [vmem:[#allocation8 + $0xd8] sm:$0xff]
      %v1172 = vld [vmem:[#allocation8 + $0xe0] sm:$0xff]
      %v1173 = vld [vmem:[#allocation8 + $0xe8] sm:$0xff]
      %v1174 = vld [vmem:[#allocation8 + $0xf0] sm:$0xff]
      %v1175 = vld [vmem:[#allocation8 + $0xf8] sm:$0xff]
      %v1176 = vld [vmem:[#allocation8 + $0x100] sm:$0xff]
      %v1177 = vld [vmem:[#allocation8 + $0x108] sm:$0xff]
      %v1178 = vld [vmem:[#allocation8 + $0x110] sm:$0xff]
      %v1179 = vld [vmem:[#allocation8 + $0x118] sm:$0xff]
      %v1180 = vld [vmem:[#allocation8 + $0x120] sm:$0xff]
      %v1181 = vld [vmem:[#allocation8 + $0x128] sm:$0xff]
      %v1182 = vld [vmem:[#allocation8 + $0x130] sm:$0xff]
      %v1183 = vld [vmem:[#allocation8 + $0x138] sm:$0xff]
      %v1184 = vld [vmem:[#allocation8 + $0x140] sm:$0xff]
      %v1185 = vld [vmem:[#allocation8 + $0x148] sm:$0xff]
      %v1186 = vld [vmem:[#allocation8 + $0x150] sm:$0xff]
      %v1187 = vld [vmem:[#allocation8 + $0x158] sm:$0xff]
      %v1188 = vld [vmem:[#allocation8 + $0x160] sm:$0xff]
      %v1189 = vld [vmem:[#allocation8 + $0x168] sm:$0xff]
      %v1190 = vld [vmem:[#allocation8 + $0x170] sm:$0xff]
      %v1191 = vld [vmem:[#allocation8 + $0x178] sm:$0xff]
      %v1192 = vld [vmem:[#allocation8 + $0x180] sm:$0xff]
      %v1193 = vld [vmem:[#allocation8 + $0x188] sm:$0xff]
      %v1194 = vld [vmem:[#allocation8 + $0x190] sm:$0xff]
      %v1195 = vld [vmem:[#allocation8 + $0x198] sm:$0xff]
      %v1196 = vld [vmem:[#allocation8 + $0x1a0] sm:$0xff]
      %v1197 = vld [vmem:[#allocation8 + $0x1a8] sm:$0xff]
      %v1198 = vld [vmem:[#allocation8 + $0x1b0] sm:$0xff]
      %v1199 = vld [vmem:[#allocation8 + $0x1b8] sm:$0xff]
      %v1200 = vld [vmem:[#allocation8 + $0x1c0] sm:$0xff]
      %v1201 = vld [vmem:[#allocation8 + $0x1c8] sm:$0xff]
      %v1202 = vld [vmem:[#allocation8 + $0x1d0] sm:$0xff]
      %v1203 = vld [vmem:[#allocation8 + $0x1d8] sm:$0xff]
      %v1204 = vld [vmem:[#allocation8 + $0x1e0] sm:$0xff]
      %v1205 = vld [vmem:[#allocation8 + $0x1e8] sm:$0xff]
      %v1206 = vld [vmem:[#allocation8 + $0x1f0] sm:$0xff]
      %v1207 = vld [vmem:[#allocation8 + $0x1f8] sm:$0xff]
      %v1208 = vld [vmem:[#allocation8 + $0x200] sm:$0xff]
      %v1209 = vld [vmem:[#allocation8 + $0x208] sm:$0xff]
      %v1210 = vld [vmem:[#allocation8 + $0x210] sm:$0xff]
      %v1211 = vld [vmem:[#allocation8 + $0x218] sm:$0xff]
      %v1212 = vld [vmem:[#allocation8 + $0x220] sm:$0xff]
      %v1213 = vld [vmem:[#allocation8 + $0x228] sm:$0xff]
      %v1214 = vld [vmem:[#allocation8 + $0x230] sm:$0xff]
      %v1215 = vld [vmem:[#allocation8 + $0x238] sm:$0xff]
      %v1216 = vld [vmem:[#allocation8 + $0x240] sm:$0xff]
      %v1217 = vld [vmem:[#allocation8 + $0x248] sm:$0xff]
      %v1218 = vld [vmem:[#allocation8 + $0x250] sm:$0xff]
      %v1219 = vld [vmem:[#allocation8 + $0x258] sm:$0xff]
      %v1220 = vld [vmem:[#allocation8 + $0x260] sm:$0xff]
      %v1221 = vld [vmem:[#allocation8 + $0x268] sm:$0xff]
      %v1222 = vld [vmem:[#allocation8 + $0x270] sm:$0xff]
      %v1223 = vld [vmem:[#allocation8 + $0x278] sm:$0xff]
      %v1224 = vld [vmem:[#allocation8 + $0x280] sm:$0xff]
      %v1225 = vld [vmem:[#allocation8 + $0x288] sm:$0xff]
      %v1226 = vld [vmem:[#allocation8 + $0x290] sm:$0xff]
      %v1227 = vld [vmem:[#allocation8 + $0x298] sm:$0xff]
      %v1228 = vld [vmem:[#allocation8 + $0x2a0] sm:$0xff]
      %v1229 = vld [vmem:[#allocation8 + $0x2a8] sm:$0xff]
      %v1230 = vld [vmem:[#allocation8 + $0x2b0] sm:$0xff]
      %v1231 = vld [vmem:[#allocation8 + $0x2b8] sm:$0xff]
      %v1232 = vld [vmem:[#allocation8 + $0x2c0] sm:$0xff]
      %v1233 = vld [vmem:[#allocation8 + $0x2c8] sm:$0xff]
      %v1234 = vld [vmem:[#allocation8 + $0x2d0] sm:$0xff]
      %v1235 = vld [vmem:[#allocation8 + $0x2d8] sm:$0xff]
      %v1236 = vld [vmem:[#allocation8 + $0x2e0] sm:$0xff]
      %v1237 = vld [vmem:[#allocation8 + $0x2e8] sm:$0xff]
      %v1238 = vld [vmem:[#allocation8 + $0x2f0] sm:$0xff]
      %v1239 = vld [vmem:[#allocation8 + $0x2f8] sm:$0xff]
      %v1240 = vld [vmem:[#allocation8 + $0x300] sm:$0xff]
      %v1241 = vld [vmem:[#allocation8 + $0x308] sm:$0xff]
      %v1242 = vld [vmem:[#allocation8 + $0x310] sm:$0xff]
      %v1243 = vld [vmem:[#allocation8 + $0x318] sm:$0xff]
      %v1244 = vld [vmem:[#allocation8 + $0x320] sm:$0xff]
      %v1245 = vld [vmem:[#allocation8 + $0x328] sm:$0xff]
      %v1246 = vld [vmem:[#allocation8 + $0x330] sm:$0xff]
      %v1247 = vld [vmem:[#allocation8 + $0x338] sm:$0xff]
      %v1248 = vld [vmem:[#allocation8 + $0x340] sm:$0xff]
      %v1249 = vld [vmem:[#allocation8 + $0x348] sm:$0xff]
      %v1250 = vld [vmem:[#allocation8 + $0x350] sm:$0xff]
      %v1251 = vld [vmem:[#allocation8 + $0x358] sm:$0xff]
      %v1252 = vld [vmem:[#allocation8 + $0x360] sm:$0xff]
      %v1253 = vld [vmem:[#allocation8 + $0x368] sm:$0xff]
      %v1254 = vld [vmem:[#allocation8 + $0x370] sm:$0xff]
      %v1255 = vld [vmem:[#allocation8 + $0x378] sm:$0xff]
      %v1256 = vld [vmem:[#allocation8 + $0x380] sm:$0xff]
      %v1257 = vld [vmem:[#allocation8 + $0x388] sm:$0xff]
      %v1258 = vld [vmem:[#allocation8 + $0x390] sm:$0xff]
      %v1259 = vld [vmem:[#allocation8 + $0x398] sm:$0xff]
      %v1260 = vld [vmem:[#allocation8 + $0x3a0] sm:$0xff]
      %v1261 = vld [vmem:[#allocation8 + $0x3a8] sm:$0xff]
      %v1262 = vld [vmem:[#allocation8 + $0x3b0] sm:$0xff]
      %v1263 = vld [vmem:[#allocation8 + $0x3b8] sm:$0xff]
      %v1264 = vld [vmem:[#allocation8 + $0x3c0] sm:$0xff]
      %v1265 = vld [vmem:[#allocation8 + $0x3c8] sm:$0xff]
      %v1266 = vld [vmem:[#allocation8 + $0x3d0] sm:$0xff]
      %v1267 = vld [vmem:[#allocation8 + $0x3d8] sm:$0xff]
      %v1268 = vld [vmem:[#allocation8 + $0x3e0] sm:$0xff]
      %v1269 = vld [vmem:[#allocation8 + $0x3e8] sm:$0xff]
      %v1270 = vld [vmem:[#allocation8 + $0x3f0] sm:$0xff]
      %v1271 = vld [vmem:[#allocation8 + $0x3f8] sm:$0xff]
      %v1272 = vld [vmem:[#allocation8 + $0x400] sm:$0xff]
      %v1273 = vld [vmem:[#allocation8 + $0x408] sm:$0xff]
      %v1274 = vld [vmem:[#allocation8 + $0x410] sm:$0xff]
      %v1275 = vld [vmem:[#allocation8 + $0x418] sm:$0xff]
      %v1276 = vld [vmem:[#allocation8 + $0x420] sm:$0xff]
      %v1277 = vld [vmem:[#allocation8 + $0x428] sm:$0xff]
      %v1278 = vld [vmem:[#allocation8 + $0x430] sm:$0xff]
      %v1279 = vld [vmem:[#allocation8 + $0x438] sm:$0xff]
      %v1280 = vld [vmem:[#allocation8 + $0x440] sm:$0xff]
      %v1281 = vld [vmem:[#allocation8 + $0x448] sm:$0xff]
      %v1282 = vld [vmem:[#allocation8 + $0x450] sm:$0xff]
      %v1283 = vld [vmem:[#allocation8 + $0x458] sm:$0xff]
      %v1284 = vld [vmem:[#allocation8 + $0x460] sm:$0xff]
      %v1285 = vld [vmem:[#allocation8 + $0x468] sm:$0xff]
      %v1286 = vld [vmem:[#allocation8 + $0x470] sm:$0xff]
      %v1287 = vld [vmem:[#allocation8 + $0x478] sm:$0xff]
      %v1288 = vld [vmem:[#allocation8 + $0x480] sm:$0xff]
      %v1289 = vld [vmem:[#allocation8 + $0x488] sm:$0xff]
      %v1290 = vld [vmem:[#allocation8 + $0x490] sm:$0xff]
      %v1291 = vld [vmem:[#allocation8 + $0x498] sm:$0xff]
      %v1292 = vld [vmem:[#allocation8 + $0x4a0] sm:$0xff]
      %v1293 = vld [vmem:[#allocation8 + $0x4a8] sm:$0xff]
      %v1294 = vld [vmem:[#allocation8 + $0x4b0] sm:$0xff]
      %v1295 = vld [vmem:[#allocation8 + $0x4b8] sm:$0xff]
      %v1296 = vld [vmem:[#allocation8 + $0x4c0] sm:$0xff]
      %v1297 = vld [vmem:[#allocation8 + $0x4c8] sm:$0xff]
      %v1298 = vld [vmem:[#allocation8 + $0x4d0] sm:$0xff]
      %v1299 = vld [vmem:[#allocation8 + $0x4d8] sm:$0xff]
      %v1300 = vld [vmem:[#allocation8 + $0x4e0] sm:$0xff]
      %v1301 = vld [vmem:[#allocation8 + $0x4e8] sm:$0xff]
      %v1302 = vld [vmem:[#allocation8 + $0x4f0] sm:$0xff]
      %v1303 = vld [vmem:[#allocation8 + $0x4f8] sm:$0xff]
      %v1304 = vld [vmem:[#allocation8 + $0x500] sm:$0xff]
      %v1305 = vld [vmem:[#allocation8 + $0x508] sm:$0xff]
      %v1306 = vld [vmem:[#allocation8 + $0x510] sm:$0xff]
      %v1307 = vld [vmem:[#allocation8 + $0x518] sm:$0xff]
      %v1308 = vld [vmem:[#allocation8 + $0x520] sm:$0xff]
      %v1309 = vld [vmem:[#allocation8 + $0x528] sm:$0xff]
      %v1310 = vld [vmem:[#allocation8 + $0x530] sm:$0xff]
      %v1311 = vld [vmem:[#allocation8 + $0x538] sm:$0xff]
      %v1312 = vld [vmem:[#allocation8 + $0x540] sm:$0xff]
      %v1313 = vld [vmem:[#allocation8 + $0x548] sm:$0xff]
      %v1314 = vld [vmem:[#allocation8 + $0x550] sm:$0xff]
      %v1315 = vld [vmem:[#allocation8 + $0x558] sm:$0xff]
      %v1316 = vld [vmem:[#allocation8 + $0x560] sm:$0xff]
      %v1317 = vld [vmem:[#allocation8 + $0x568] sm:$0xff]
      %v1318 = vld [vmem:[#allocation8 + $0x570] sm:$0xff]
      %v1319 = vld [vmem:[#allocation8 + $0x578] sm:$0xff]
      %v1320 = vld [vmem:[#allocation8 + $0x580] sm:$0xff]
      %v1321 = vld [vmem:[#allocation8 + $0x588] sm:$0xff]
      %v1322 = vld [vmem:[#allocation8 + $0x590] sm:$0xff]
      %v1323 = vld [vmem:[#allocation8 + $0x598] sm:$0xff]
      %v1324 = vld [vmem:[#allocation8 + $0x5a0] sm:$0xff]
      %v1325 = vld [vmem:[#allocation8 + $0x5a8] sm:$0xff]
      %v1326 = vld [vmem:[#allocation8 + $0x5b0] sm:$0xff]
      %v1327 = vld [vmem:[#allocation8 + $0x5b8] sm:$0xff]
      %v1328 = vld [vmem:[#allocation8 + $0x5c0] sm:$0xff]
      %v1329 = vld [vmem:[#allocation8 + $0x5c8] sm:$0xff]
      %v1330 = vld [vmem:[#allocation8 + $0x5d0] sm:$0xff]
      %v1331 = vld [vmem:[#allocation8 + $0x5d8] sm:$0xff]
      %v1332 = vld [vmem:[#allocation8 + $0x5e0] sm:$0xff]
      %v1333 = vld [vmem:[#allocation8 + $0x5e8] sm:$0xff]
      %v1334 = vld [vmem:[#allocation8 + $0x5f0] sm:$0xff]
      %v1335 = vld [vmem:[#allocation8 + $0x5f8] sm:$0xff]
      %v1336 = vld [vmem:[#allocation8 + $0x600] sm:$0xff]
      %v1337 = vld [vmem:[#allocation8 + $0x608] sm:$0xff]
      %v1338 = vld [vmem:[#allocation8 + $0x610] sm:$0xff]
      %v1339 = vld [vmem:[#allocation8 + $0x618] sm:$0xff]
      %v1340 = vld [vmem:[#allocation8 + $0x620] sm:$0xff]
      %v1341 = vld [vmem:[#allocation8 + $0x628] sm:$0xff]
      %v1342 = vld [vmem:[#allocation8 + $0x630] sm:$0xff]
      %v1343 = vld [vmem:[#allocation8 + $0x638] sm:$0xff]
      %v1344 = vld [vmem:[#allocation8 + $0x640] sm:$0xff]
      %v1345 = vld [vmem:[#allocation8 + $0x648] sm:$0xff]
      %v1346 = vld [vmem:[#allocation8 + $0x650] sm:$0xff]
      %v1347 = vld [vmem:[#allocation8 + $0x658] sm:$0xff]
      %v1348 = vld [vmem:[#allocation8 + $0x660] sm:$0xff]
      %v1349 = vld [vmem:[#allocation8 + $0x668] sm:$0xff]
      %v1350 = vld [vmem:[#allocation8 + $0x670] sm:$0xff]
      %v1351 = vld [vmem:[#allocation8 + $0x678] sm:$0xff]
      %v1352 = vld [vmem:[#allocation8 + $0x680] sm:$0xff]
      %v1353 = vld [vmem:[#allocation8 + $0x688] sm:$0xff]
      %v1354 = vld [vmem:[#allocation8 + $0x690] sm:$0xff]
      %v1355 = vld [vmem:[#allocation8 + $0x698] sm:$0xff]
      %v1356 = vld [vmem:[#allocation8 + $0x6a0] sm:$0xff]
      %v1357 = vld [vmem:[#allocation8 + $0x6a8] sm:$0xff]
      %v1358 = vld [vmem:[#allocation8 + $0x6b0] sm:$0xff]
      %v1359 = vld [vmem:[#allocation8 + $0x6b8] sm:$0xff]
      %v1360 = vld [vmem:[#allocation8 + $0x6c0] sm:$0xff]
      %v1361 = vld [vmem:[#allocation8 + $0x6c8] sm:$0xff]
      %v1362 = vld [vmem:[#allocation8 + $0x6d0] sm:$0xff]
      %v1363 = vld [vmem:[#allocation8 + $0x6d8] sm:$0xff]
      %v1364 = vld [vmem:[#allocation8 + $0x6e0] sm:$0xff]
      %v1365 = vld [vmem:[#allocation8 + $0x6e8] sm:$0xff]
      %v1366 = vld [vmem:[#allocation8 + $0x6f0] sm:$0xff]
      %v1367 = vld [vmem:[#allocation8 + $0x6f8] sm:$0xff]
      %v1368 = vld [vmem:[#allocation8 + $0x700] sm:$0xff]
      %v1369 = vld [vmem:[#allocation8 + $0x708] sm:$0xff]
      %v1370 = vld [vmem:[#allocation8 + $0x710] sm:$0xff]
      %v1371 = vld [vmem:[#allocation8 + $0x718] sm:$0xff]
      %v1372 = vld [vmem:[#allocation8 + $0x720] sm:$0xff]
      %v1373 = vld [vmem:[#allocation8 + $0x728] sm:$0xff]
      %v1374 = vld [vmem:[#allocation8 + $0x730] sm:$0xff]
      %v1375 = vld [vmem:[#allocation8 + $0x738] sm:$0xff]
      %v1376 = vld [vmem:[#allocation8 + $0x740] sm:$0xff]
      %v1377 = vld [vmem:[#allocation8 + $0x748] sm:$0xff]
      %v1378 = vld [vmem:[#allocation8 + $0x750] sm:$0xff]
      %v1379 = vld [vmem:[#allocation8 + $0x758] sm:$0xff]
      %v1380 = vld [vmem:[#allocation8 + $0x760] sm:$0xff]
      %v1381 = vld [vmem:[#allocation8 + $0x768] sm:$0xff]
      %v1382 = vld [vmem:[#allocation8 + $0x770] sm:$0xff]
      %v1383 = vld [vmem:[#allocation8 + $0x778] sm:$0xff]
      %v1384 = vld [vmem:[#allocation8 + $0x780] sm:$0xff]
      %v1385 = vld [vmem:[#allocation8 + $0x788] sm:$0xff]
      %v1386 = vld [vmem:[#allocation8 + $0x790] sm:$0xff]
      %v1387 = vld [vmem:[#allocation8 + $0x798] sm:$0xff]
      %v1388 = vld [vmem:[#allocation8 + $0x7a0] sm:$0xff]
      %v1389 = vld [vmem:[#allocation8 + $0x7a8] sm:$0xff]
      %v1390 = vld [vmem:[#allocation8 + $0x7b0] sm:$0xff]
      %v1391 = vld [vmem:[#allocation8 + $0x7b8] sm:$0xff]
      %v1392 = vld [vmem:[#allocation8 + $0x7c0] sm:$0xff]
      %v1393 = vld [vmem:[#allocation8 + $0x7c8] sm:$0xff]
      %v1394 = vld [vmem:[#allocation8 + $0x7d0] sm:$0xff]
      %v1395 = vld [vmem:[#allocation8 + $0x7d8] sm:$0xff]
      %v1396 = vld [vmem:[#allocation8 + $0x7e0] sm:$0xff]
      %v1397 = vld [vmem:[#allocation8 + $0x7e8] sm:$0xff]
      %v1398 = vld [vmem:[#allocation8 + $0x7f0] sm:$0xff]
      %v1399 = vld [vmem:[#allocation8 + $0x7f8] sm:$0xff]
      %v1400 = vld [vmem:[%s4] sm:$0x1]
      %v1402 = vlaneseq
      %v1403 = vshrl.u32 %v1402, 7
      %v1404 = vsub.s32 0, %v1403
      %v1405 = vrot.slane %v1400, %v1404
      %v1415 = vcombine.high %v1136, %v1136
      %v1416 = vcombine.high %v1137, %v1137
      %v1417 = vcombine.high %v1138, %v1138
      %v1418 = vcombine.high %v1139, %v1139
      %v1419 = vcombine.high %v1140, %v1140
      %v1420 = vcombine.high %v1141, %v1141
      %v1421 = vcombine.high %v1142, %v1142
      %v1422 = vcombine.high %v1143, %v1143
      %1431 = vmatprep.subr.mxu0 0.0
      %1432 = vmatpush1.msra.mxu0 %v1159
      %1433 = vmatprep.subr.mxu0 0.0
      %1434 = vmatpush1.msra.mxu0 %v1158
      %1435 = vmatprep.subr.mxu0 0.0
      %1436 = vmatpush1.msra.mxu0 %v1157
      %1437 = vmatprep.subr.mxu0 0.0
      %1438 = vmatpush1.msra.mxu0 %v1156
      %1439 = vmatprep.subr.mxu0 0.0
      %1440 = vmatpush1.msra.mxu0 %v1155
      %1441 = vmatprep.subr.mxu0 0.0
      %1442 = vmatpush1.msra.mxu0 %v1154
      %1443 = vmatprep.subr.mxu0 0.0
      %1444 = vmatpush1.msra.mxu0 %v1153
      %1445 = vmatprep.subr.mxu0 0.0
      %1446 = vmatpush1.msra.mxu0 %v1152
      %1447 = vmatprep.subr.mxu0 0.0
      %1448 = vmatpush1.msra.mxu0 %v1151
      %1449 = vmatprep.subr.mxu0 0.0
      %1450 = vmatpush1.msra.mxu0 %v1150
      %1451 = vmatprep.subr.mxu0 0.0
      %1452 = vmatpush1.msra.mxu0 %v1149
      %1453 = vmatprep.subr.mxu0 0.0
      %1454 = vmatpush1.msra.mxu0 %v1148
      %1455 = vmatprep.subr.mxu0 0.0
      %1456 = vmatpush1.msra.mxu0 %v1147
      %1457 = vmatprep.subr.mxu0 0.0
      %1458 = vmatpush1.msra.mxu0 %v1146
      %1459 = vmatprep.subr.mxu0 0.0
      %1460 = vmatpush1.msra.mxu0 %v1145
      %1461 = vmatprep.subr.mxu0 0.0
      %1462 = vmatpush1.msra.mxu0 %v1144
      %1463 = vmatprep.subr.mxu0 0.0
      %1464 = vmatpush2.msra.mxu0 %v1175
      %1465 = vmatprep.subr.mxu0 0.0
      %1466 = vmatpush2.msra.mxu0 %v1174
      %1467 = vmatprep.subr.mxu0 0.0
      %1468 = vmatpush2.msra.mxu0 %v1173
      %1469 = vmatprep.subr.mxu0 0.0
      %1470 = vmatpush2.msra.mxu0 %v1172
      %1471 = vmatprep.subr.mxu0 0.0
      %1472 = vmatpush2.msra.mxu0 %v1171
      %1473 = vmatprep.subr.mxu0 0.0
      %1474 = vmatpush2.msra.mxu0 %v1170
      %1475 = vmatprep.subr.mxu0 0.0
      %1476 = vmatpush2.msra.mxu0 %v1169
      %1477 = vmatprep.subr.mxu0 0.0
      %1478 = vmatpush2.msra.mxu0 %v1168
      %1479 = vmatprep.subr.mxu0 0.0
      %1480 = vmatpush2.msra.mxu0 %v1167
      %1481 = vmatprep.subr.mxu0 0.0
      %1482 = vmatpush2.msra.mxu0 %v1166
      %1483 = vmatprep.subr.mxu0 0.0
      %1484 = vmatpush2.msra.mxu0 %v1165
      %1485 = vmatprep.subr.mxu0 0.0
      %1486 = vmatpush2.msra.mxu0 %v1164
      %1487 = vmatprep.subr.mxu0 0.0
      %1488 = vmatpush2.msra.mxu0 %v1163
      %1489 = vmatprep.subr.mxu0 0.0
      %1490 = vmatpush2.msra.mxu0 %v1162
      %1491 = vmatprep.subr.mxu0 0.0
      %1492 = vmatpush2.msra.mxu0 %v1161
      %1493 = vmatprep.subr.mxu0 0.0
      %1494 = vmatpush2.msra.mxu0 %v1160
      %1495 = vmatprep.mubr.f32.mxu0 %v1415
      %1496 = vmatmul.mubr.f32.gmra.mxu0 %v1136
      %v1497 = vpop.f32.mrf.mxu0
      %v1498 = vadd.f32 %v1405, %v1497
      %v1499 = vpop.f32.mrf.mxu0
      %1500 = vdwg.mxu0
      %1501 = vmatprep.subr.mxu0 0.0
      %1502 = vmatpush1.msra.mxu0 %v1191
      %1503 = vmatprep.subr.mxu0 0.0
      %1504 = vmatpush1.msra.mxu0 %v1190
      %1505 = vmatprep.subr.mxu0 0.0
      %1506 = vmatpush1.msra.mxu0 %v1189
      %1507 = vmatprep.subr.mxu0 0.0
      %1508 = vmatpush1.msra.mxu0 %v1188
      %1509 = vmatprep.subr.mxu0 0.0
      %1510 = vmatpush1.msra.mxu0 %v1187
      %1511 = vmatprep.subr.mxu0 0.0
      %1512 = vmatpush1.msra.mxu0 %v1186
      %1513 = vmatprep.subr.mxu0 0.0
      %1514 = vmatpush1.msra.mxu0 %v1185
      %1515 = vmatprep.subr.mxu0 0.0
      %1516 = vmatpush1.msra.mxu0 %v1184
      %1517 = vmatprep.subr.mxu0 0.0
      %1518 = vmatpush1.msra.mxu0 %v1183
      %1519 = vmatprep.subr.mxu0 0.0
      %1520 = vmatpush1.msra.mxu0 %v1182
      %1521 = vmatprep.subr.mxu0 0.0
      %1522 = vmatpush1.msra.mxu0 %v1181
      %1523 = vmatprep.subr.mxu0 0.0
      %1524 = vmatpush1.msra.mxu0 %v1180
      %1525 = vmatprep.subr.mxu0 0.0
      %1526 = vmatpush1.msra.mxu0 %v1179
      %1527 = vmatprep.subr.mxu0 0.0
      %1528 = vmatpush1.msra.mxu0 %v1178
      %1529 = vmatprep.subr.mxu0 0.0
      %1530 = vmatpush1.msra.mxu0 %v1177
      %1531 = vmatprep.subr.mxu0 0.0
      %1532 = vmatpush1.msra.mxu0 %v1176
      %1533 = vmatprep.subr.mxu0 0.0
      %1534 = vmatpush2.msra.mxu0 %v1207
      %1535 = vmatprep.subr.mxu0 0.0
      %1536 = vmatpush2.msra.mxu0 %v1206
      %1537 = vmatprep.subr.mxu0 0.0
      %1538 = vmatpush2.msra.mxu0 %v1205
      %1539 = vmatprep.subr.mxu0 0.0
      %1540 = vmatpush2.msra.mxu0 %v1204
      %1541 = vmatprep.subr.mxu0 0.0
      %1542 = vmatpush2.msra.mxu0 %v1203
      %1543 = vmatprep.subr.mxu0 0.0
      %1544 = vmatpush2.msra.mxu0 %v1202
      %1545 = vmatprep.subr.mxu0 0.0
      %1546 = vmatpush2.msra.mxu0 %v1201
      %1547 = vmatprep.subr.mxu0 0.0
      %1548 = vmatpush2.msra.mxu0 %v1200
      %1549 = vmatprep.subr.mxu0 0.0
      %1550 = vmatpush2.msra.mxu0 %v1199
      %1551 = vmatprep.subr.mxu0 0.0
      %1552 = vmatpush2.msra.mxu0 %v1198
      %1553 = vmatprep.subr.mxu0 0.0
      %1554 = vmatpush2.msra.mxu0 %v1197
      %1555 = vmatprep.subr.mxu0 0.0
      %1556 = vmatpush2.msra.mxu0 %v1196
      %1557 = vmatprep.subr.mxu0 0.0
      %1558 = vmatpush2.msra.mxu0 %v1195
      %1559 = vmatprep.subr.mxu0 0.0
      %1560 = vmatpush2.msra.mxu0 %v1194
      %1561 = vmatprep.subr.mxu0 0.0
      %1562 = vmatpush2.msra.mxu0 %v1193
      %1563 = vmatprep.subr.mxu0 0.0
      %1564 = vmatpush2.msra.mxu0 %v1192
      %1565 = vmatprep.mubr.f32.mxu0 %v1416
      %1566 = vmatmul.mubr.f32.gmra.mxu0 %v1137
      %v1567 = vpop.f32.mrf.mxu0
      %v1568 = vadd.f32 %v1498, %v1567
      %v1569 = vpop.f32.mrf.mxu0
      %1570 = vdwg.mxu0
      %1571 = vmatprep.subr.mxu0 0.0
      %1572 = vmatpush1.msra.mxu0 %v1223
      %1573 = vmatprep.subr.mxu0 0.0
      %1574 = vmatpush1.msra.mxu0 %v1222
      %1575 = vmatprep.subr.mxu0 0.0
      %1576 = vmatpush1.msra.mxu0 %v1221
      %1577 = vmatprep.subr.mxu0 0.0
      %1578 = vmatpush1.msra.mxu0 %v1220
      %1579 = vmatprep.subr.mxu0 0.0
      %1580 = vmatpush1.msra.mxu0 %v1219
      %1581 = vmatprep.subr.mxu0 0.0
      %1582 = vmatpush1.msra.mxu0 %v1218
      %1583 = vmatprep.subr.mxu0 0.0
      %1584 = vmatpush1.msra.mxu0 %v1217
      %1585 = vmatprep.subr.mxu0 0.0
      %1586 = vmatpush1.msra.mxu0 %v1216
      %1587 = vmatprep.subr.mxu0 0.0
      %1588 = vmatpush1.msra.mxu0 %v1215
      %1589 = vmatprep.subr.mxu0 0.0
      %1590 = vmatpush1.msra.mxu0 %v1214
      %1591 = vmatprep.subr.mxu0 0.0
      %1592 = vmatpush1.msra.mxu0 %v1213
      %1593 = vmatprep.subr.mxu0 0.0
      %1594 = vmatpush1.msra.mxu0 %v1212
      %1595 = vmatprep.subr.mxu0 0.0
      %1596 = vmatpush1.msra.mxu0 %v1211
      %1597 = vmatprep.subr.mxu0 0.0
      %1598 = vmatpush1.msra.mxu0 %v1210
      %1599 = vmatprep.subr.mxu0 0.0
      %1600 = vmatpush1.msra.mxu0 %v1209
      %1601 = vmatprep.subr.mxu0 0.0
      %1602 = vmatpush1.msra.mxu0 %v1208
      %1603 = vmatprep.subr.mxu0 0.0
      %1604 = vmatpush2.msra.mxu0 %v1239
      %1605 = vmatprep.subr.mxu0 0.0
      %1606 = vmatpush2.msra.mxu0 %v1238
      %1607 = vmatprep.subr.mxu0 0.0
      %1608 = vmatpush2.msra.mxu0 %v1237
      %1609 = vmatprep.subr.mxu0 0.0
      %1610 = vmatpush2.msra.mxu0 %v1236
      %1611 = vmatprep.subr.mxu0 0.0
      %1612 = vmatpush2.msra.mxu0 %v1235
      %1613 = vmatprep.subr.mxu0 0.0
      %1614 = vmatpush2.msra.mxu0 %v1234
      %1615 = vmatprep.subr.mxu0 0.0
      %1616 = vmatpush2.msra.mxu0 %v1233
      %1617 = vmatprep.subr.mxu0 0.0
      %1618 = vmatpush2.msra.mxu0 %v1232
      %1619 = vmatprep.subr.mxu0 0.0
      %1620 = vmatpush2.msra.mxu0 %v1231
      %1621 = vmatprep.subr.mxu0 0.0
      %1622 = vmatpush2.msra.mxu0 %v1230
      %1623 = vmatprep.subr.mxu0 0.0
      %1624 = vmatpush2.msra.mxu0 %v1229
      %1625 = vmatprep.subr.mxu0 0.0
      %1626 = vmatpush2.msra.mxu0 %v1228
      %1627 = vmatprep.subr.mxu0 0.0
      %1628 = vmatpush2.msra.mxu0 %v1227
      %1629 = vmatprep.subr.mxu0 0.0
      %1630 = vmatpush2.msra.mxu0 %v1226
      %1631 = vmatprep.subr.mxu0 0.0
      %1632 = vmatpush2.msra.mxu0 %v1225
      %1633 = vmatprep.subr.mxu0 0.0
      %1634 = vmatpush2.msra.mxu0 %v1224
      %1635 = vmatprep.mubr.f32.mxu0 %v1417
      %1636 = vmatmul.mubr.f32.gmra.mxu0 %v1138
      %v1637 = vpop.f32.mrf.mxu0
      %v1638 = vadd.f32 %v1568, %v1637
      %v1639 = vpop.f32.mrf.mxu0
      %1640 = vdwg.mxu0
      %1641 = vmatprep.subr.mxu0 0.0
      %1642 = vmatpush1.msra.mxu0 %v1255
      %1643 = vmatprep.subr.mxu0 0.0
      %1644 = vmatpush1.msra.mxu0 %v1254
      %1645 = vmatprep.subr.mxu0 0.0
      %1646 = vmatpush1.msra.mxu0 %v1253
      %1647 = vmatprep.subr.mxu0 0.0
      %1648 = vmatpush1.msra.mxu0 %v1252
      %1649 = vmatprep.subr.mxu0 0.0
      %1650 = vmatpush1.msra.mxu0 %v1251
      %1651 = vmatprep.subr.mxu0 0.0
      %1652 = vmatpush1.msra.mxu0 %v1250
      %1653 = vmatprep.subr.mxu0 0.0
      %1654 = vmatpush1.msra.mxu0 %v1249
      %1655 = vmatprep.subr.mxu0 0.0
      %1656 = vmatpush1.msra.mxu0 %v1248
      %1657 = vmatprep.subr.mxu0 0.0
      %1658 = vmatpush1.msra.mxu0 %v1247
      %1659 = vmatprep.subr.mxu0 0.0
      %1660 = vmatpush1.msra.mxu0 %v1246
      %1661 = vmatprep.subr.mxu0 0.0
      %1662 = vmatpush1.msra.mxu0 %v1245
      %1663 = vmatprep.subr.mxu0 0.0
      %1664 = vmatpush1.msra.mxu0 %v1244
      %1665 = vmatprep.subr.mxu0 0.0
      %1666 = vmatpush1.msra.mxu0 %v1243
      %1667 = vmatprep.subr.mxu0 0.0
      %1668 = vmatpush1.msra.mxu0 %v1242
      %1669 = vmatprep.subr.mxu0 0.0
      %1670 = vmatpush1.msra.mxu0 %v1241
      %1671 = vmatprep.subr.mxu0 0.0
      %1672 = vmatpush1.msra.mxu0 %v1240
      %1673 = vmatprep.subr.mxu0 0.0
      %1674 = vmatpush2.msra.mxu0 %v1271
      %1675 = vmatprep.subr.mxu0 0.0
      %1676 = vmatpush2.msra.mxu0 %v1270
      %1677 = vmatprep.subr.mxu0 0.0
      %1678 = vmatpush2.msra.mxu0 %v1269
      %1679 = vmatprep.subr.mxu0 0.0
      %1680 = vmatpush2.msra.mxu0 %v1268
      %1681 = vmatprep.subr.mxu0 0.0
      %1682 = vmatpush2.msra.mxu0 %v1267
      %1683 = vmatprep.subr.mxu0 0.0
      %1684 = vmatpush2.msra.mxu0 %v1266
      %1685 = vmatprep.subr.mxu0 0.0
      %1686 = vmatpush2.msra.mxu0 %v1265
      %1687 = vmatprep.subr.mxu0 0.0
      %1688 = vmatpush2.msra.mxu0 %v1264
      %1689 = vmatprep.subr.mxu0 0.0
      %1690 = vmatpush2.msra.mxu0 %v1263
      %1691 = vmatprep.subr.mxu0 0.0
      %1692 = vmatpush2.msra.mxu0 %v1262
      %1693 = vmatprep.subr.mxu0 0.0
      %1694 = vmatpush2.msra.mxu0 %v1261
      %1695 = vmatprep.subr.mxu0 0.0
      %1696 = vmatpush2.msra.mxu0 %v1260
      %1697 = vmatprep.subr.mxu0 0.0
      %1698 = vmatpush2.msra.mxu0 %v1259
      %1699 = vmatprep.subr.mxu0 0.0
      %1700 = vmatpush2.msra.mxu0 %v1258
      %1701 = vmatprep.subr.mxu0 0.0
      %1702 = vmatpush2.msra.mxu0 %v1257
      %1703 = vmatprep.subr.mxu0 0.0
      %1704 = vmatpush2.msra.mxu0 %v1256
      %1705 = vmatprep.mubr.f32.mxu0 %v1418
      %1706 = vmatmul.mubr.f32.gmra.mxu0 %v1139
      %v1707 = vpop.f32.mrf.mxu0
      %v1708 = vadd.f32 %v1638, %v1707
      %v1709 = vpop.f32.mrf.mxu0
      %1710 = vdwg.mxu0
      %1711 = vmatprep.subr.mxu0 0.0
      %1712 = vmatpush1.msra.mxu0 %v1287
      %1713 = vmatprep.subr.mxu0 0.0
      %1714 = vmatpush1.msra.mxu0 %v1286
      %1715 = vmatprep.subr.mxu0 0.0
      %1716 = vmatpush1.msra.mxu0 %v1285
      %1717 = vmatprep.subr.mxu0 0.0
      %1718 = vmatpush1.msra.mxu0 %v1284
      %1719 = vmatprep.subr.mxu0 0.0
      %1720 = vmatpush1.msra.mxu0 %v1283
      %1721 = vmatprep.subr.mxu0 0.0
      %1722 = vmatpush1.msra.mxu0 %v1282
      %1723 = vmatprep.subr.mxu0 0.0
      %1724 = vmatpush1.msra.mxu0 %v1281
      %1725 = vmatprep.subr.mxu0 0.0
      %1726 = vmatpush1.msra.mxu0 %v1280
      %1727 = vmatprep.subr.mxu0 0.0
      %1728 = vmatpush1.msra.mxu0 %v1279
      %1729 = vmatprep.subr.mxu0 0.0
      %1730 = vmatpush1.msra.mxu0 %v1278
      %1731 = vmatprep.subr.mxu0 0.0
      %1732 = vmatpush1.msra.mxu0 %v1277
      %1733 = vmatprep.subr.mxu0 0.0
      %1734 = vmatpush1.msra.mxu0 %v1276
      %1735 = vmatprep.subr.mxu0 0.0
      %1736 = vmatpush1.msra.mxu0 %v1275
      %1737 = vmatprep.subr.mxu0 0.0
      %1738 = vmatpush1.msra.mxu0 %v1274
      %1739 = vmatprep.subr.mxu0 0.0
      %1740 = vmatpush1.msra.mxu0 %v1273
      %1741 = vmatprep.subr.mxu0 0.0
      %1742 = vmatpush1.msra.mxu0 %v1272
      %1743 = vmatprep.subr.mxu0 0.0
      %1744 = vmatpush2.msra.mxu0 %v1303
      %1745 = vmatprep.subr.mxu0 0.0
      %1746 = vmatpush2.msra.mxu0 %v1302
      %1747 = vmatprep.subr.mxu0 0.0
      %1748 = vmatpush2.msra.mxu0 %v1301
      %1749 = vmatprep.subr.mxu0 0.0
      %1750 = vmatpush2.msra.mxu0 %v1300
      %1751 = vmatprep.subr.mxu0 0.0
      %1752 = vmatpush2.msra.mxu0 %v1299
      %1753 = vmatprep.subr.mxu0 0.0
      %1754 = vmatpush2.msra.mxu0 %v1298
      %1755 = vmatprep.subr.mxu0 0.0
      %1756 = vmatpush2.msra.mxu0 %v1297
      %1757 = vmatprep.subr.mxu0 0.0
      %1758 = vmatpush2.msra.mxu0 %v1296
      %1759 = vmatprep.subr.mxu0 0.0
      %1760 = vmatpush2.msra.mxu0 %v1295
      %1761 = vmatprep.subr.mxu0 0.0
      %1762 = vmatpush2.msra.mxu0 %v1294
      %1763 = vmatprep.subr.mxu0 0.0
      %1764 = vmatpush2.msra.mxu0 %v1293
      %1765 = vmatprep.subr.mxu0 0.0
      %1766 = vmatpush2.msra.mxu0 %v1292
      %1767 = vmatprep.subr.mxu0 0.0
      %1768 = vmatpush2.msra.mxu0 %v1291
      %1769 = vmatprep.subr.mxu0 0.0
      %1770 = vmatpush2.msra.mxu0 %v1290
      %1771 = vmatprep.subr.mxu0 0.0
      %1772 = vmatpush2.msra.mxu0 %v1289
      %1773 = vmatprep.subr.mxu0 0.0
      %1774 = vmatpush2.msra.mxu0 %v1288
      %1775 = vmatprep.mubr.f32.mxu0 %v1419
      %1776 = vmatmul.mubr.f32.gmra.mxu0 %v1140
      %v1777 = vpop.f32.mrf.mxu0
      %v1778 = vadd.f32 %v1708, %v1777
      %v1779 = vpop.f32.mrf.mxu0
      %1780 = vdwg.mxu0
      %1781 = vmatprep.subr.mxu0 0.0
      %1782 = vmatpush1.msra.mxu0 %v1319
      %1783 = vmatprep.subr.mxu0 0.0
      %1784 = vmatpush1.msra.mxu0 %v1318
      %1785 = vmatprep.subr.mxu0 0.0
      %1786 = vmatpush1.msra.mxu0 %v1317
      %1787 = vmatprep.subr.mxu0 0.0
      %1788 = vmatpush1.msra.mxu0 %v1316
      %1789 = vmatprep.subr.mxu0 0.0
      %1790 = vmatpush1.msra.mxu0 %v1315
      %1791 = vmatprep.subr.mxu0 0.0
      %1792 = vmatpush1.msra.mxu0 %v1314
      %1793 = vmatprep.subr.mxu0 0.0
      %1794 = vmatpush1.msra.mxu0 %v1313
      %1795 = vmatprep.subr.mxu0 0.0
      %1796 = vmatpush1.msra.mxu0 %v1312
      %1797 = vmatprep.subr.mxu0 0.0
      %1798 = vmatpush1.msra.mxu0 %v1311
      %1799 = vmatprep.subr.mxu0 0.0
      %1800 = vmatpush1.msra.mxu0 %v1310
      %1801 = vmatprep.subr.mxu0 0.0
      %1802 = vmatpush1.msra.mxu0 %v1309
      %1803 = vmatprep.subr.mxu0 0.0
      %1804 = vmatpush1.msra.mxu0 %v1308
      %1805 = vmatprep.subr.mxu0 0.0
      %1806 = vmatpush1.msra.mxu0 %v1307
      %1807 = vmatprep.subr.mxu0 0.0
      %1808 = vmatpush1.msra.mxu0 %v1306
      %1809 = vmatprep.subr.mxu0 0.0
      %1810 = vmatpush1.msra.mxu0 %v1305
      %1811 = vmatprep.subr.mxu0 0.0
      %1812 = vmatpush1.msra.mxu0 %v1304
      %1813 = vmatprep.subr.mxu0 0.0
      %1814 = vmatpush2.msra.mxu0 %v1335
      %1815 = vmatprep.subr.mxu0 0.0
      %1816 = vmatpush2.msra.mxu0 %v1334
      %1817 = vmatprep.subr.mxu0 0.0
      %1818 = vmatpush2.msra.mxu0 %v1333
      %1819 = vmatprep.subr.mxu0 0.0
      %1820 = vmatpush2.msra.mxu0 %v1332
      %1821 = vmatprep.subr.mxu0 0.0
      %1822 = vmatpush2.msra.mxu0 %v1331
      %1823 = vmatprep.subr.mxu0 0.0
      %1824 = vmatpush2.msra.mxu0 %v1330
      %1825 = vmatprep.subr.mxu0 0.0
      %1826 = vmatpush2.msra.mxu0 %v1329
      %1827 = vmatprep.subr.mxu0 0.0
      %1828 = vmatpush2.msra.mxu0 %v1328
      %1829 = vmatprep.subr.mxu0 0.0
      %1830 = vmatpush2.msra.mxu0 %v1327
      %1831 = vmatprep.subr.mxu0 0.0
      %1832 = vmatpush2.msra.mxu0 %v1326
      %1833 = vmatprep.subr.mxu0 0.0
      %1834 = vmatpush2.msra.mxu0 %v1325
      %1835 = vmatprep.subr.mxu0 0.0
      %1836 = vmatpush2.msra.mxu0 %v1324
      %1837 = vmatprep.subr.mxu0 0.0
      %1838 = vmatpush2.msra.mxu0 %v1323
      %1839 = vmatprep.subr.mxu0 0.0
      %1840 = vmatpush2.msra.mxu0 %v1322
      %1841 = vmatprep.subr.mxu0 0.0
      %1842 = vmatpush2.msra.mxu0 %v1321
      %1843 = vmatprep.subr.mxu0 0.0
      %1844 = vmatpush2.msra.mxu0 %v1320
      %1845 = vmatprep.mubr.f32.mxu0 %v1420
      %1846 = vmatmul.mubr.f32.gmra.mxu0 %v1141
      %v1847 = vpop.f32.mrf.mxu0
      %v1848 = vadd.f32 %v1778, %v1847
      %v1849 = vpop.f32.mrf.mxu0
      %1850 = vdwg.mxu0
      %1851 = vmatprep.subr.mxu0 0.0
      %1852 = vmatpush1.msra.mxu0 %v1351
      %1853 = vmatprep.subr.mxu0 0.0
      %1854 = vmatpush1.msra.mxu0 %v1350
      %1855 = vmatprep.subr.mxu0 0.0
      %1856 = vmatpush1.msra.mxu0 %v1349
      %1857 = vmatprep.subr.mxu0 0.0
      %1858 = vmatpush1.msra.mxu0 %v1348
      %1859 = vmatprep.subr.mxu0 0.0
      %1860 = vmatpush1.msra.mxu0 %v1347
      %1861 = vmatprep.subr.mxu0 0.0
      %1862 = vmatpush1.msra.mxu0 %v1346
      %1863 = vmatprep.subr.mxu0 0.0
      %1864 = vmatpush1.msra.mxu0 %v1345
      %1865 = vmatprep.subr.mxu0 0.0
      %1866 = vmatpush1.msra.mxu0 %v1344
      %1867 = vmatprep.subr.mxu0 0.0
      %1868 = vmatpush1.msra.mxu0 %v1343
      %1869 = vmatprep.subr.mxu0 0.0
      %1870 = vmatpush1.msra.mxu0 %v1342
      %1871 = vmatprep.subr.mxu0 0.0
      %1872 = vmatpush1.msra.mxu0 %v1341
      %1873 = vmatprep.subr.mxu0 0.0
      %1874 = vmatpush1.msra.mxu0 %v1340
      %1875 = vmatprep.subr.mxu0 0.0
      %1876 = vmatpush1.msra.mxu0 %v1339
      %1877 = vmatprep.subr.mxu0 0.0
      %1878 = vmatpush1.msra.mxu0 %v1338
      %1879 = vmatprep.subr.mxu0 0.0
      %1880 = vmatpush1.msra.mxu0 %v1337
      %1881 = vmatprep.subr.mxu0 0.0
      %1882 = vmatpush1.msra.mxu0 %v1336
      %1883 = vmatprep.subr.mxu0 0.0
      %1884 = vmatpush2.msra.mxu0 %v1367
      %1885 = vmatprep.subr.mxu0 0.0
      %1886 = vmatpush2.msra.mxu0 %v1366
      %1887 = vmatprep.subr.mxu0 0.0
      %1888 = vmatpush2.msra.mxu0 %v1365
      %1889 = vmatprep.subr.mxu0 0.0
      %1890 = vmatpush2.msra.mxu0 %v1364
      %1891 = vmatprep.subr.mxu0 0.0
      %1892 = vmatpush2.msra.mxu0 %v1363
      %1893 = vmatprep.subr.mxu0 0.0
      %1894 = vmatpush2.msra.mxu0 %v1362
      %1895 = vmatprep.subr.mxu0 0.0
      %1896 = vmatpush2.msra.mxu0 %v1361
      %1897 = vmatprep.subr.mxu0 0.0
      %1898 = vmatpush2.msra.mxu0 %v1360
      %1899 = vmatprep.subr.mxu0 0.0
      %1900 = vmatpush2.msra.mxu0 %v1359
      %1901 = vmatprep.subr.mxu0 0.0
      %1902 = vmatpush2.msra.mxu0 %v1358
      %1903 = vmatprep.subr.mxu0 0.0
      %1904 = vmatpush2.msra.mxu0 %v1357
      %1905 = vmatprep.subr.mxu0 0.0
      %1906 = vmatpush2.msra.mxu0 %v1356
      %1907 = vmatprep.subr.mxu0 0.0
      %1908 = vmatpush2.msra.mxu0 %v1355
      %1909 = vmatprep.subr.mxu0 0.0
      %1910 = vmatpush2.msra.mxu0 %v1354
      %1911 = vmatprep.subr.mxu0 0.0
      %1912 = vmatpush2.msra.mxu0 %v1353
      %1913 = vmatprep.subr.mxu0 0.0
      %1914 = vmatpush2.msra.mxu0 %v1352
      %1915 = vmatprep.mubr.f32.mxu0 %v1421
      %1916 = vmatmul.mubr.f32.gmra.mxu0 %v1142
      %v1917 = vpop.f32.mrf.mxu0
      %v1918 = vadd.f32 %v1848, %v1917
      %v1919 = vpop.f32.mrf.mxu0
      %1920 = vdwg.mxu0
      %1921 = vmatprep.subr.mxu0 0.0
      %1922 = vmatpush1.msra.mxu0 %v1383
      %1923 = vmatprep.subr.mxu0 0.0
      %1924 = vmatpush1.msra.mxu0 %v1382
      %1925 = vmatprep.subr.mxu0 0.0
      %1926 = vmatpush1.msra.mxu0 %v1381
      %1927 = vmatprep.subr.mxu0 0.0
      %1928 = vmatpush1.msra.mxu0 %v1380
      %1929 = vmatprep.subr.mxu0 0.0
      %1930 = vmatpush1.msra.mxu0 %v1379
      %1931 = vmatprep.subr.mxu0 0.0
      %1932 = vmatpush1.msra.mxu0 %v1378
      %1933 = vmatprep.subr.mxu0 0.0
      %1934 = vmatpush1.msra.mxu0 %v1377
      %1935 = vmatprep.subr.mxu0 0.0
      %1936 = vmatpush1.msra.mxu0 %v1376
      %1937 = vmatprep.subr.mxu0 0.0
      %1938 = vmatpush1.msra.mxu0 %v1375
      %1939 = vmatprep.subr.mxu0 0.0
      %1940 = vmatpush1.msra.mxu0 %v1374
      %1941 = vmatprep.subr.mxu0 0.0
      %1942 = vmatpush1.msra.mxu0 %v1373
      %1943 = vmatprep.subr.mxu0 0.0
      %1944 = vmatpush1.msra.mxu0 %v1372
      %1945 = vmatprep.subr.mxu0 0.0
      %1946 = vmatpush1.msra.mxu0 %v1371
      %1947 = vmatprep.subr.mxu0 0.0
      %1948 = vmatpush1.msra.mxu0 %v1370
      %1949 = vmatprep.subr.mxu0 0.0
      %1950 = vmatpush1.msra.mxu0 %v1369
      %1951 = vmatprep.subr.mxu0 0.0
      %1952 = vmatpush1.msra.mxu0 %v1368
      %1953 = vmatprep.subr.mxu0 0.0
      %1954 = vmatpush2.msra.mxu0 %v1399
      %1955 = vmatprep.subr.mxu0 0.0
      %1956 = vmatpush2.msra.mxu0 %v1398
      %1957 = vmatprep.subr.mxu0 0.0
      %1958 = vmatpush2.msra.mxu0 %v1397
      %1959 = vmatprep.subr.mxu0 0.0
      %1960 = vmatpush2.msra.mxu0 %v1396
      %1961 = vmatprep.subr.mxu0 0.0
      %1962 = vmatpush2.msra.mxu0 %v1395
      %1963 = vmatprep.subr.mxu0 0.0
      %1964 = vmatpush2.msra.mxu0 %v1394
      %1965 = vmatprep.subr.mxu0 0.0
      %1966 = vmatpush2.msra.mxu0 %v1393
      %1967 = vmatprep.subr.mxu0 0.0
      %1968 = vmatpush2.msra.mxu0 %v1392
      %1969 = vmatprep.subr.mxu0 0.0
      %1970 = vmatpush2.msra.mxu0 %v1391
      %1971 = vmatprep.subr.mxu0 0.0
      %1972 = vmatpush2.msra.mxu0 %v1390
      %1973 = vmatprep.subr.mxu0 0.0
      %1974 = vmatpush2.msra.mxu0 %v1389
      %1975 = vmatprep.subr.mxu0 0.0
      %1976 = vmatpush2.msra.mxu0 %v1388
      %1977 = vmatprep.subr.mxu0 0.0
      %1978 = vmatpush2.msra.mxu0 %v1387
      %1979 = vmatprep.subr.mxu0 0.0
      %1980 = vmatpush2.msra.mxu0 %v1386
      %1981 = vmatprep.subr.mxu0 0.0
      %1982 = vmatpush2.msra.mxu0 %v1385
      %1983 = vmatprep.subr.mxu0 0.0
      %1984 = vmatpush2.msra.mxu0 %v1384
      %1985 = vmatprep.mubr.f32.mxu0 %v1422
      %1986 = vmatmul.mubr.f32.gmra.mxu0 %v1143
      %v1987 = vpop.f32.mrf.mxu0
      %v1988 = vadd.f32 %v1918, %v1987
      %v1989 = vpop.f32.mrf.mxu0
      %1990 = vdwg.mxu0
      %1991 = vst [vmem:[#allocation9] sm:$0xf] %v1988
    $region41: #{tpu_custom_call.1} parent=1 // pred_fallthru
      _
    // Predicated region
    $region42: #{tpu_custom_call.1} parent=1 // pred_check
      _
    $region43: #{tpu_custom_call.1} parent=1 // pred_check_branch
      %1993 = sbr.rel (0) target = $region45
    $region44: #{tpu_custom_call.1} parent=1 // pred_region
      %s1995 = ssub.s32 64, 64
      %1996 = vsyncadd [#allocation5], %s1995
      %s1998 = sshll.u32 [#allocation9], 4
      %s1999 = int_to_ptr.vmem [resolvable:$true] %s1998
      %2001 = dma.vmem_to_hbm [thread:$0]  %s1999, 64, %s5, [#allocation5]
    $region45: #{tpu_custom_call.1} parent=1 // pred_fallthru
      _
    // Predicated region
    $region46: #{tpu_custom_call.1} parent=1 // pred_check
      _
    $region47: #{tpu_custom_call.1} parent=1 // pred_check_branch
      %2003 = sbr.rel (0) target = $region49
    $region48: #{tpu_custom_call.1} parent=1 // pred_region
      %2004 = dma.done [#allocation5], 64
    $region49: #{tpu_custom_call.1} parent=1 // pred_fallthru
      _
    %2005 = vsyncpa [#allocation4], 1
    %2006 = vsyncpa [#allocation7], 1
    %2007 = vsyncpa [#allocation5], 1

</llo_original>
